<compile_context>
chip_gen: v7x
topology: tpu7x:2x2x1
jax: 0.10.0
libtpu: 0.0.40
codegen_flags: <defaults>
</compile_context>

<pallas_src>
import functools
import math

import jax
import jax.numpy as jnp
import numpy as np
from jax.experimental import pallas as pl
from jax.experimental.pallas import tpu as pltpu

_LOG2E = 1.4426950408889634
_NEG_BIG = -1e30   # finite "-inf" for kv masking (avoids inf-inf NaN paths)


# --------------------------------------------------------------------------
# Kernels
# --------------------------------------------------------------------------
def _qkv_proj_kernel(x_ref, wq_ref, wk_ref, wv_ref, bq_ref, bk_ref, bv_ref,
                     q_ref, k_ref, v_ref):
    # x_ref: (1, TR, D); w*_ref: (D, Dp) bf16 (grid-invariant); b*_ref: (1, Dp) f32.
    x = x_ref[0].astype(wq_ref.dtype)          # bf16 MXU operand
    # Three separate dots, each stored immediately: only one (TR, Dp) f32
    # intermediate is live at a time (vs a fused (TR, 3*Dp) result).
    # TODO(synk): for very large D, add a reduction-tiled grid axis over D_in
    # with an f32 accumulator so the weight slabs also fit v7x's 64 MiB VMEM.
    q = jnp.dot(x, wq_ref[...], preferred_element_type=jnp.float32) + bq_ref[...]
    q_ref[0] = q.astype(q_ref.dtype)
    k = jnp.dot(x, wk_ref[...], preferred_element_type=jnp.float32) + bk_ref[...]
    k_ref[0] = k.astype(k_ref.dtype)
    v = jnp.dot(x, wv_ref[...], preferred_element_type=jnp.float32) + bv_ref[...]
    v_ref[0] = v.astype(v_ref.dtype)


def _flash_attn_kernel(q_ref, k_ref, v_ref, o_ref, m_sc, l_sc, acc_sc, *,
                       seq_len, kv_tile, mask_kv):
    ki = pl.program_id(2)

    @pl.when(ki == 0)
    def _init():
        m_sc[...] = jnp.full_like(m_sc, -jnp.inf)
        l_sc[...] = jnp.zeros_like(l_sc)
        acc_sc[...] = jnp.zeros_like(acc_sc)

    q = q_ref[0]                                   # (TQ, Dp) bf16, pre-scaled by log2e/sqrt(D)
    k = k_ref[0]                                   # (TK, Dp) bf16
    # Q @ K^T without materializing K^T; scores are already in log2 domain.
    s = jax.lax.dot_general(q, k, (((1,), (1,)), ((), ())),
                            preferred_element_type=jnp.float32)   # (TQ, TK) f32
    if mask_kv:
        col = ki * kv_tile + jax.lax.broadcasted_iota(jnp.int32, s.shape, 1)
        s = jnp.where(col < seq_len, s, _NEG_BIG)

    m_prev = m_sc[...]
    m_new = jnp.maximum(m_prev, jnp.max(s, axis=-1, keepdims=True))
    alpha = jnp.exp2(m_prev - m_new)               # EUP pow2 path
    p = jnp.exp2(s - m_new)
    l_sc[...] = alpha * l_sc[...] + jnp.sum(p, axis=-1, keepdims=True)
    acc_sc[...] = alpha * acc_sc[...] + jnp.dot(
        p.astype(v_ref.dtype), v_ref[0], preferred_element_type=jnp.float32)
    m_sc[...] = m_new

    @pl.when(ki == pl.num_programs(2) - 1)
    def _finalize():
        inv_l = pl.reciprocal(l_sc[...], approx=False)   # exact; runs once per tile
        o_ref[0] = (acc_sc[...] * inv_l).astype(o_ref.dtype)


def _attn_single_kv_kernel(q_ref, k_ref, v_ref, o_ref, *, seq_len, mask_kv):
    # Fast path: the full (padded) sequence is one kv tile -> plain softmax,
    # no online-softmax carry, no scratch.
    q = q_ref[0]
    k = k_ref[0]
    s = jax.lax.dot_general(q, k, (((1,), (1,)), ((), ())),
                            preferred_element_type=jnp.float32)   # (TQ, Sp) f32
    if mask_kv:
        col = jax.lax.broadcasted_iota(jnp.int32, s.shape, 1)
        s = jnp.where(col < seq_len, s, _NEG_BIG)
    m = jnp.max(s, axis=-1, keepdims=True)
    p = jnp.exp2(s - m)                                           # log2e folded into Q
    l = jnp.sum(p, axis=-1, keepdims=True)
    o = jnp.dot(p.astype(v_ref.dtype), v_ref[0],
                preferred_element_type=jnp.float32)
    o_ref[0] = (o * pl.reciprocal(l, approx=False)).astype(o_ref.dtype)


# --------------------------------------------------------------------------
# Wrapper helpers
# --------------------------------------------------------------------------
def _round_up(x, m):
    return (x + m - 1) // m * m


def _pick_tile(n, target):
    """Largest multiple of 8 that divides n and is <= target; n if n <= target.
    n is always a multiple of 8 here, so 8 always qualifies."""
    if n <= target:
        return n
    t = max(8, target - target % 8)
    for c in range(t, 7, -8):
        if n % c == 0:
            return c
    return 8


def _vmem_cap_bytes():
    """Per-generation scoped-VMEM ceiling: ~48 MiB on v7x (64 MiB physical),
    100 MiB on v5e/v6e (128 MiB physical)."""
    cap = 100 * 1024 * 1024
    try:
        info = pltpu.get_tpu_info()
        phys = getattr(info, "vmem_capacity_bytes", None)
        if phys:
            cap = min(cap, int(0.75 * int(phys)))
    except Exception:
        pass
    return max(cap, 32 * 1024 * 1024)


def _vmem_limit_bytes(blocks, cap):
    """Scoped-VMEM estimate from (shape, dtype, n_buffers) triples, with
    1.5x headroom, a 32 MiB floor and a per-generation cap."""
    total = 0
    for shape, dtype, nbuf in blocks:
        n = 1
        for d in shape:
            n *= d
        total += nbuf * n * np.dtype(dtype).itemsize
    return int(min(max(int(1.5 * total), 32 * 1024 * 1024), cap))


# --------------------------------------------------------------------------
# Wrapper
# --------------------------------------------------------------------------
def self_attention(x, wq, wk, wv, bq, bk, bv, *,
                   q_tile=512, kv_tile=512, row_tile=256,
                   compute_dtype=jnp.bfloat16):
    """x: (B, S, D); wq/wk/wv: (D, D) already transposed to (in, out);
    bq/bk/bv: (D,).  Matches PyTorch SelfAttention.forward."""
    B, S, D = x.shape
    out_dtype = x.dtype
    # Fold 1/sqrt(D) *and* log2(e) into the Q projection so the attention
    # kernels can use exp2 directly (EUP pow2 path, no per-element ln2 mul).
    q_scale = _LOG2E / math.sqrt(float(D))

    # Lane-dense feature dim (multiple of 128) -> unmasked vector stores.
    # Zero-padded q/k columns contribute 0 to QK^T; padded v columns sliced off.
    Dp = _round_up(D, 128)

    def prep_w(w, b, s=1.0):
        w = w.astype(jnp.float32) * s
        b = b.astype(jnp.float32) * s
        if Dp != D:
            w = jnp.pad(w, ((0, 0), (0, Dp - D)))
            b = jnp.pad(b, (0, Dp - D))
        return w.astype(compute_dtype), b.reshape(1, Dp)   # f32 bias row

    wq_p, bq_p = prep_w(wq, bq, q_scale)
    wk_p, bk_p = prep_w(wk, bk)
    wv_p, bv_p = prep_w(wv, bv)

    # ---- sequence padding + tile selection ---------------------------------
    # Pad S so a >=128 (or full) divisor always exists; odd S never degenerates
    # into a full (S, S) score tile.
    Sp = _round_up(S, 8) if S <= 128 else _round_up(S, 128)

    q_target, kv_target, r_target = q_tile, kv_tile, row_tile
    if B == 1 and Sp >= 16:
        # v7x has 2 TensorCores sharded over "parallel" grid axes; keep
        # B * num_q_tiles >= 2 so neither core idles.
        q_target = min(q_target, Sp // 2)
        r_target = min(r_target, Sp // 2)

    TR = _pick_tile(Sp, r_target)
    TQ = _pick_tile(Sp, q_target)
    TK = _pick_tile(Sp, kv_target)

    x_p = x if Sp == S else jnp.pad(x, ((0, 0), (0, Sp - S), (0, 0)))
    mask_kv = Sp != S
    vmem_cap = _vmem_cap_bytes()

    # ---- kernel 1: QKV projection ------------------------------------------
    def _proj_call(single_buffer_weights):
        if single_buffer_weights:
            # Grid-invariant weight/bias blocks: single-buffer them.
            w_spec = pl.BlockSpec((D, Dp), lambda b, r: (0, 0),
                                  pipeline_mode=pl.Buffered(1))
            b_spec = pl.BlockSpec((1, Dp), lambda b, r: (0, 0),
                                  pipeline_mode=pl.Buffered(1))
            w_bufs = 1
        else:
            w_spec = pl.BlockSpec((D, Dp), lambda b, r: (0, 0))
            b_spec = pl.BlockSpec((1, Dp), lambda b, r: (0, 0))
            w_bufs = 2
        proj_vmem = _vmem_limit_bytes([
            ((TR, D), x.dtype, 2),
            ((D, Dp), compute_dtype, 3 * w_bufs),
            ((1, Dp), jnp.float32, 3 * w_bufs),
            ((TR, Dp), compute_dtype, 6),     # q/k/v outputs, double-buffered
            ((TR, Dp), jnp.float32, 1),       # live f32 dot result
        ], vmem_cap)
        qkv_shape = jax.ShapeDtypeStruct((B, Sp, Dp), compute_dtype)
        return pl.pallas_call(
            _qkv_proj_kernel,
            out_shape=(qkv_shape, qkv_shape, qkv_shape),
            grid_spec=pltpu.PrefetchScalarGridSpec(
                num_scalar_prefetch=0,
                grid=(B, Sp // TR),
                in_specs=[
                    pl.BlockSpec((1, TR, D), lambda b, r: (b, r, 0)),   # x
                    w_spec, w_spec, w_spec,                             # Wq, Wk, Wv
                    b_spec, b_spec, b_spec,                             # bq, bk, bv
                ],
                out_specs=[pl.BlockSpec((1, TR, Dp), lambda b, r: (b, r, 0))] * 3,
            ),
            compiler_params=pltpu.CompilerParams(
                dimension_semantics=("parallel", "parallel"),
                vmem_limit_bytes=proj_vmem),
        )(x_p, wq_p, wk_p, wv_p, bq_p, bk_p, bv_p)

    try:
        q_a, k_a, v_a = _proj_call(True)
    except Exception:
        # Fallback if this JAX build rejects Buffered(1) single-buffering.
        q_a, k_a, v_a = _proj_call(False)

    # ---- kernel 2: attention ------------------------------------------------
    num_q = Sp // TQ
    num_kv = Sp // TK

    if num_kv == 1:
        attn_vmem = _vmem_limit_bytes([
            ((TQ, Dp), compute_dtype, 2),
            ((TK, Dp), compute_dtype, 4),     # k + v blocks
            ((TQ, Dp), out_dtype, 2),
            ((TQ, TK), jnp.float32, 2),       # scores + probs live
        ], vmem_cap)
        kernel = functools.partial(_attn_single_kv_kernel,
                                   seq_len=S, mask_kv=mask_kv)
        out = pl.pallas_call(
            kernel,
            out_shape=jax.ShapeDtypeStruct((B, Sp, Dp), out_dtype),
            grid_spec=pltpu.PrefetchScalarGridSpec(
                num_scalar_prefetch=0,
                grid=(B, num_q),
                in_specs=[
                    pl.BlockSpec((1, TQ, Dp), lambda b, qi: (b, qi, 0)),  # q
                    pl.BlockSpec((1, TK, Dp), lambda b, qi: (b, 0, 0)),   # k
                    pl.BlockSpec((1, TK, Dp), lambda b, qi: (b, 0, 0)),   # v
                ],
                out_specs=pl.BlockSpec((1, TQ, Dp), lambda b, qi: (b, qi, 0)),
            ),
            compiler_params=pltpu.CompilerParams(
                dimension_semantics=("parallel", "parallel"),
                vmem_limit_bytes=attn_vmem),
        )(q_a, k_a, v_a)
    else:
        attn_vmem = _vmem_limit_bytes([
            ((TQ, Dp), compute_dtype, 2),
            ((TK, Dp), compute_dtype, 4),     # k + v blocks
            ((TQ, Dp), out_dtype, 2),
            ((TQ, 1), jnp.float32, 2),        # m, l scratch
            ((TQ, Dp), jnp.float32, 1),       # acc scratch
            ((TQ, TK), jnp.float32, 2),       # scores + probs live
        ], vmem_cap)
        kernel = functools.partial(_flash_attn_kernel,
                                   seq_len=S, kv_tile=TK, mask_kv=mask_kv)
        out = pl.pallas_call(
            kernel,
            out_shape=jax.ShapeDtypeStruct((B, Sp, Dp), out_dtype),
            grid_spec=pltpu.PrefetchScalarGridSpec(
                num_scalar_prefetch=0,
                grid=(B, num_q, num_kv),
                in_specs=[
                    pl.BlockSpec((1, TQ, Dp), lambda b, qi, ki: (b, qi, 0)),  # q
                    pl.BlockSpec((1, TK, Dp), lambda b, qi, ki: (b, ki, 0)),  # k
                    pl.BlockSpec((1, TK, Dp), lambda b, qi, ki: (b, ki, 0)),  # v
                ],
                out_specs=pl.BlockSpec((1, TQ, Dp), lambda b, qi, ki: (b, qi, 0)),
                scratch_shapes=[
                    pltpu.VMEM((TQ, 1), jnp.float32),     # running max
                    pltpu.VMEM((TQ, 1), jnp.float32),     # running denom
                    pltpu.VMEM((TQ, Dp), jnp.float32),    # output accumulator
                ],
            ),
            compiler_params=pltpu.CompilerParams(
                dimension_semantics=("parallel", "parallel", "arbitrary"),
                vmem_limit_bytes=attn_vmem),
        )(q_a, k_a, v_a)

    if Sp != S or Dp != D:
        out = out[:, :S, :D]
    return out


# --------------------------------------------------------------------------
# Pure-JAX f32 reference (matches the PyTorch forward)
# --------------------------------------------------------------------------
def self_attention_ref(x, wq, wk, wv, bq, bk, bv):
    x = x.astype(jnp.float32)
    q = x @ wq + bq
    k = x @ wk + bk
    v = x @ wv + bv
    d = x.shape[-1]
    scores = jnp.einsum("bsd,btd->bst", q, k) / jnp.sqrt(jnp.float32(d))
    w = jax.nn.softmax(scores, axis=-1)
    return jnp.einsum("bst,btd->bsd", w, v)


if __name__ == "__main__":
    B, S, D = 2, 8, 32   # batch, seq, input_dim

    key = jax.random.PRNGKey(0)
    kx, kq, kk, kv, kbq, kbk, kbv = jax.random.split(key, 7)

    # bf16 activations -> bf16 MXU operands inside the kernels.
    x = jax.random.normal(kx, (B, S, D), dtype=jnp.float32).astype(jnp.bfloat16)

    # PyTorch nn.Linear-style init, built directly in the (in, out) layout.
    bound = 1.0 / math.sqrt(D)
    wq = jax.random.uniform(kq, (D, D), jnp.float32, -bound, bound)
    wk = jax.random.uniform(kk, (D, D), jnp.float32, -bound, bound)
    wv = jax.random.uniform(kv, (D, D), jnp.float32, -bound, bound)
    bq = jax.random.uniform(kbq, (D,), jnp.float32, -bound, bound)
    bk = jax.random.uniform(kbk, (D,), jnp.float32, -bound, bound)
    bv = jax.random.uniform(kbv, (D,), jnp.float32, -bound, bound)

    out = self_attention(x, wq, wk, wv, bq, bk, bv)
    out = jax.block_until_ready(out)
    assert out.shape == (B, S, D)
    assert out.dtype == x.dtype

    ref = self_attention_ref(x, wq, wk, wv, bq, bk, bv)
    out_f32 = np.asarray(out, dtype=np.float32)
    ref_f32 = np.asarray(ref, dtype=np.float32)
    err = np.max(np.abs(out_f32 - ref_f32))
    # bf16 MXU operands => looser tolerance than pure f32.
    assert np.allclose(out_f32, ref_f32, atol=5e-2, rtol=5e-2), (
        f"max abs err = {err}")

    print("KERNEL_OK")
</pallas_src>

<mosaic_0001>
module attributes {stable_mosaic.version = 11 : i64} {
  func.func @_qkv_proj_kernel(%arg0: i32, %arg1: i32, %arg2: memref<1x8x32xbf16, #tpu.memory_space<vmem>>, %arg3: memref<32x128xbf16, #tpu.memory_space<vmem>>, %arg4: memref<32x128xbf16, #tpu.memory_space<vmem>>, %arg5: memref<32x128xbf16, #tpu.memory_space<vmem>>, %arg6: memref<1x128xf32, #tpu.memory_space<vmem>>, %arg7: memref<1x128xf32, #tpu.memory_space<vmem>>, %arg8: memref<1x128xf32, #tpu.memory_space<vmem>>, %arg9: memref<1x8x128xbf16, #tpu.memory_space<vmem>>, %arg10: memref<1x8x128xbf16, #tpu.memory_space<vmem>>, %arg11: memref<1x8x128xbf16, #tpu.memory_space<vmem>>) attributes {dimension_semantics = [#tpu.dimension_semantics<parallel>, #tpu.dimension_semantics<parallel>], iteration_bounds = array<i64: 2, 1>, scalar_prefetch = 0 : i64, scratch_operands = 0 : i64, tpu.core_type = #tpu.core_type<tc>, window_params = [{transform_indices = @transform_0, window_bounds = array<i64: 1, 8, 32>}, {pipeline_mode = #tpu.pipeline_mode<synchronous>, transform_indices = @transform_1, window_bounds = array<i64: 32, 128>}, {pipeline_mode = #tpu.pipeline_mode<synchronous>, transform_indices = @transform_2, window_bounds = array<i64: 32, 128>}, {pipeline_mode = #tpu.pipeline_mode<synchronous>, transform_indices = @transform_3, window_bounds = array<i64: 32, 128>}, {pipeline_mode = #tpu.pipeline_mode<synchronous>, transform_indices = @transform_4, window_bounds = array<i64: 1, 128>}, {pipeline_mode = #tpu.pipeline_mode<synchronous>, transform_indices = @transform_5, window_bounds = array<i64: 1, 128>}, {pipeline_mode = #tpu.pipeline_mode<synchronous>, transform_indices = @transform_6, window_bounds = array<i64: 1, 128>}, {transform_indices = @transform_7, window_bounds = array<i64: 1, 8, 128>}, {transform_indices = @transform_8, window_bounds = array<i64: 1, 8, 128>}, {transform_indices = @transform_9, window_bounds = array<i64: 1, 8, 128>}]} {
    %c0 = arith.constant 0 : index
    %c0_0 = arith.constant 0 : index
    %c0_1 = arith.constant 0 : index
    %0 = vector.load %arg2[%c0, %c0_0, %c0_1] : memref<1x8x32xbf16, #tpu.memory_space<vmem>>, vector<1x8x32xbf16>
    %1 = vector.shape_cast %0 : vector<1x8x32xbf16> to vector<8x32xbf16>
    %c0_2 = arith.constant 0 : index
    %c0_3 = arith.constant 0 : index
    %2 = vector.load %arg3[%c0_2, %c0_3] : memref<32x128xbf16, #tpu.memory_space<vmem>>, vector<32x128xbf16>
    %cst = arith.constant dense<0.000000e+00> : vector<8x128xf32>
    %3 = tpu.matmul %1, %2, %cst {dimension_numbers = #tpu.dot_dimension_numbers<[1], [0], [0], [1], [0, 0, 1, 1], [], []>} : vector<8x32xbf16>, vector<32x128xbf16>, vector<8x128xf32> -> vector<8x128xf32>
    %c0_4 = arith.constant 0 : index
    %c0_5 = arith.constant 0 : index
    %4 = vector.load %arg6[%c0_4, %c0_5] : memref<1x128xf32, #tpu.memory_space<vmem>>, vector<1x128xf32>
    %5 = vector.broadcast %4 : vector<1x128xf32> to vector<8x128xf32>
    %6 = arith.addf %3, %5 : vector<8x128xf32>
    %7 = arith.truncf %6 : vector<8x128xf32> to vector<8x128xbf16>
    %c0_6 = arith.constant 0 : index
    %c0_7 = arith.constant 0 : index
    %c0_8 = arith.constant 0 : index
    %8 = vector.load %arg9[%c0_6, %c0_7, %c0_8] : memref<1x8x128xbf16, #tpu.memory_space<vmem>>, vector<1x8x128xbf16>
    %9 = vector.shape_cast %8 : vector<1x8x128xbf16> to vector<8x128xbf16>
    %10 = vector.shape_cast %7 : vector<8x128xbf16> to vector<1x8x128xbf16>
    tpu.vector_store %arg9[%c0_6, %c0_7, %c0_8], %10 {strides = array<i32>} : memref<1x8x128xbf16, #tpu.memory_space<vmem>>, vector<1x8x128xbf16>,
    %c0_9 = arith.constant 0 : index
    %c0_10 = arith.constant 0 : index
    %11 = vector.load %arg4[%c0_9, %c0_10] : memref<32x128xbf16, #tpu.memory_space<vmem>>, vector<32x128xbf16>
    %cst_11 = arith.constant dense<0.000000e+00> : vector<8x128xf32>
    %12 = tpu.matmul %1, %11, %cst_11 {dimension_numbers = #tpu.dot_dimension_numbers<[1], [0], [0], [1], [0, 0, 1, 1], [], []>} : vector<8x32xbf16>, vector<32x128xbf16>, vector<8x128xf32> -> vector<8x128xf32>
    %c0_12 = arith.constant 0 : index
    %c0_13 = arith.constant 0 : index
    %13 = vector.load %arg7[%c0_12, %c0_13] : memref<1x128xf32, #tpu.memory_space<vmem>>, vector<1x128xf32>
    %14 = vector.broadcast %13 : vector<1x128xf32> to vector<8x128xf32>
    %15 = arith.addf %12, %14 : vector<8x128xf32>
    %16 = arith.truncf %15 : vector<8x128xf32> to vector<8x128xbf16>
    %c0_14 = arith.constant 0 : index
    %c0_15 = arith.constant 0 : index
    %c0_16 = arith.constant 0 : index
    %17 = vector.load %arg10[%c0_14, %c0_15, %c0_16] : memref<1x8x128xbf16, #tpu.memory_space<vmem>>, vector<1x8x128xbf16>
    %18 = vector.shape_cast %17 : vector<1x8x128xbf16> to vector<8x128xbf16>
    %19 = vector.shape_cast %16 : vector<8x128xbf16> to vector<1x8x128xbf16>
    tpu.vector_store %arg10[%c0_14, %c0_15, %c0_16], %19 {strides = array<i32>} : memref<1x8x128xbf16, #tpu.memory_space<vmem>>, vector<1x8x128xbf16>,
    %c0_17 = arith.constant 0 : index
    %c0_18 = arith.constant 0 : index
    %20 = vector.load %arg5[%c0_17, %c0_18] : memref<32x128xbf16, #tpu.memory_space<vmem>>, vector<32x128xbf16>
    %cst_19 = arith.constant dense<0.000000e+00> : vector<8x128xf32>
    %21 = tpu.matmul %1, %20, %cst_19 {dimension_numbers = #tpu.dot_dimension_numbers<[1], [0], [0], [1], [0, 0, 1, 1], [], []>} : vector<8x32xbf16>, vector<32x128xbf16>, vector<8x128xf32> -> vector<8x128xf32>
    %c0_20 = arith.constant 0 : index
    %c0_21 = arith.constant 0 : index
    %22 = vector.load %arg8[%c0_20, %c0_21] : memref<1x128xf32, #tpu.memory_space<vmem>>, vector<1x128xf32>
    %23 = vector.broadcast %22 : vector<1x128xf32> to vector<8x128xf32>
    %24 = arith.addf %21, %23 : vector<8x128xf32>
    %25 = arith.truncf %24 : vector<8x128xf32> to vector<8x128xbf16>
    %c0_22 = arith.constant 0 : index
    %c0_23 = arith.constant 0 : index
    %c0_24 = arith.constant 0 : index
    %26 = vector.load %arg11[%c0_22, %c0_23, %c0_24] : memref<1x8x128xbf16, #tpu.memory_space<vmem>>, vector<1x8x128xbf16>
    %27 = vector.shape_cast %26 : vector<1x8x128xbf16> to vector<8x128xbf16>
    %28 = vector.shape_cast %25 : vector<8x128xbf16> to vector<1x8x128xbf16>
    tpu.vector_store %arg11[%c0_22, %c0_23, %c0_24], %28 {strides = array<i32>} : memref<1x8x128xbf16, #tpu.memory_space<vmem>>, vector<1x8x128xbf16>,
    return
  }
  func.func @transform_0(%arg0: i32, %arg1: i32) -> (i32, i32, i32) {
    %c0_i32 = arith.constant 0 : i32
    %c0_i32_0 = arith.constant 0 : i32
    return %arg0, %arg1, %c0_i32 : i32, i32, i32
  }
  func.func @transform_1(%arg0: i32, %arg1: i32) -> (i32, i32) {
    %c0_i32 = arith.constant 0 : i32
    %c0_i32_0 = arith.constant 0 : i32
    %c0_i32_1 = arith.constant 0 : i32
    return %c0_i32, %c0_i32_0 : i32, i32
  }
  func.func @transform_2(%arg0: i32, %arg1: i32) -> (i32, i32) {
    %c0_i32 = arith.constant 0 : i32
    %c0_i32_0 = arith.constant 0 : i32
    %c0_i32_1 = arith.constant 0 : i32
    return %c0_i32, %c0_i32_0 : i32, i32
  }
  func.func @transform_3(%arg0: i32, %arg1: i32) -> (i32, i32) {
    %c0_i32 = arith.constant 0 : i32
    %c0_i32_0 = arith.constant 0 : i32
    %c0_i32_1 = arith.constant 0 : i32
    return %c0_i32, %c0_i32_0 : i32, i32
  }
  func.func @transform_4(%arg0: i32, %arg1: i32) -> (i32, i32) {
    %c0_i32 = arith.constant 0 : i32
    %c0_i32_0 = arith.constant 0 : i32
    %c0_i32_1 = arith.constant 0 : i32
    return %c0_i32, %c0_i32_0 : i32, i32
  }
  func.func @transform_5(%arg0: i32, %arg1: i32) -> (i32, i32) {
    %c0_i32 = arith.constant 0 : i32
    %c0_i32_0 = arith.constant 0 : i32
    %c0_i32_1 = arith.constant 0 : i32
    return %c0_i32, %c0_i32_0 : i32, i32
  }
  func.func @transform_6(%arg0: i32, %arg1: i32) -> (i32, i32) {
    %c0_i32 = arith.constant 0 : i32
    %c0_i32_0 = arith.constant 0 : i32
    %c0_i32_1 = arith.constant 0 : i32
    return %c0_i32, %c0_i32_0 : i32, i32
  }
  func.func @transform_7(%arg0: i32, %arg1: i32) -> (i32, i32, i32) {
    %c0_i32 = arith.constant 0 : i32
    %c0_i32_0 = arith.constant 0 : i32
    return %arg0, %arg1, %c0_i32 : i32, i32, i32
  }
  func.func @transform_8(%arg0: i32, %arg1: i32) -> (i32, i32, i32) {
    %c0_i32 = arith.constant 0 : i32
    %c0_i32_0 = arith.constant 0 : i32
    return %arg0, %arg1, %c0_i32 : i32, i32, i32
  }
  func.func @transform_9(%arg0: i32, %arg1: i32) -> (i32, i32, i32) {
    %c0_i32 = arith.constant 0 : i32
    %c0_i32_0 = arith.constant 0 : i32
    return %arg0, %arg1, %c0_i32 : i32, i32, i32
  }
}

module attributes {stable_mosaic.version = 11 : i64} {
  func.func @_qkv_proj_kernel(%arg0: i32, %arg1: i32, %arg2: memref<1x8x32xbf16, #tpu.memory_space<vmem>>, %arg3: memref<32x128xbf16, #tpu.memory_space<vmem>>, %arg4: memref<32x128xbf16, #tpu.memory_space<vmem>>, %arg5: memref<32x128xbf16, #tpu.memory_space<vmem>>, %arg6: memref<1x128xf32, #tpu.memory_space<vmem>>, %arg7: memref<1x128xf32, #tpu.memory_space<vmem>>, %arg8: memref<1x128xf32, #tpu.memory_space<vmem>>, %arg9: memref<1x8x128xbf16, #tpu.memory_space<vmem>>, %arg10: memref<1x8x128xbf16, #tpu.memory_space<vmem>>, %arg11: memref<1x8x128xbf16, #tpu.memory_space<vmem>>) attributes {dimension_semantics = [#tpu.dimension_semantics<parallel>, #tpu.dimension_semantics<parallel>], iteration_bounds = array<i64: 2, 1>, scalar_prefetch = 0 : i64, scratch_operands = 0 : i64, tpu.core_type = #tpu.core_type<tc>, window_params = [{transform_indices = @transform_0, window_bounds = array<i64: 1, 8, 32>}, {pipeline_mode = #tpu.pipeline_mode<synchronous>, transform_indices = @transform_1, window_bounds = array<i64: 32, 128>}, {pipeline_mode = #tpu.pipeline_mode<synchronous>, transform_indices = @transform_2, window_bounds = array<i64: 32, 128>}, {pipeline_mode = #tpu.pipeline_mode<synchronous>, transform_indices = @transform_3, window_bounds = array<i64: 32, 128>}, {pipeline_mode = #tpu.pipeline_mode<synchronous>, transform_indices = @transform_4, window_bounds = array<i64: 1, 128>}, {pipeline_mode = #tpu.pipeline_mode<synchronous>, transform_indices = @transform_5, window_bounds = array<i64: 1, 128>}, {pipeline_mode = #tpu.pipeline_mode<synchronous>, transform_indices = @transform_6, window_bounds = array<i64: 1, 128>}, {transform_indices = @transform_7, window_bounds = array<i64: 1, 8, 128>}, {transform_indices = @transform_8, window_bounds = array<i64: 1, 8, 128>}, {transform_indices = @transform_9, window_bounds = array<i64: 1, 8, 128>}]} {
    %c0 = arith.constant 0 : index
    %c0_0 = arith.constant 0 : index
    %c0_1 = arith.constant 0 : index
    %0 = vector.load %arg2[%c0, %c0_0, %c0_1] : memref<1x8x32xbf16, #tpu.memory_space<vmem>>, vector<1x8x32xbf16>
    %1 = vector.shape_cast %0 : vector<1x8x32xbf16> to vector<8x32xbf16>
    %c0_2 = arith.constant 0 : index
    %c0_3 = arith.constant 0 : index
    %2 = vector.load %arg3[%c0_2, %c0_3] : memref<32x128xbf16, #tpu.memory_space<vmem>>, vector<32x128xbf16>
    %cst = arith.constant dense<0.000000e+00> : vector<8x128xf32>
    %3 = tpu.matmul %1, %2, %cst {dimension_numbers = #tpu.dot_dimension_numbers<[1], [0], [0], [1], [0, 0, 1, 1], [], []>} : vector<8x32xbf16>, vector<32x128xbf16>, vector<8x128xf32> -> vector<8x128xf32>
    %c0_4 = arith.constant 0 : index
    %c0_5 = arith.constant 0 : index
    %4 = vector.load %arg6[%c0_4, %c0_5] : memref<1x128xf32, #tpu.memory_space<vmem>>, vector<1x128xf32>
    %5 = vector.broadcast %4 : vector<1x128xf32> to vector<8x128xf32>
    %6 = arith.addf %3, %5 : vector<8x128xf32>
    %7 = arith.truncf %6 : vector<8x128xf32> to vector<8x128xbf16>
    %c0_6 = arith.constant 0 : index
    %c0_7 = arith.constant 0 : index
    %c0_8 = arith.constant 0 : index
    %8 = vector.load %arg9[%c0_6, %c0_7, %c0_8] : memref<1x8x128xbf16, #tpu.memory_space<vmem>>, vector<1x8x128xbf16>
    %9 = vector.shape_cast %8 : vector<1x8x128xbf16> to vector<8x128xbf16>
    %10 = vector.shape_cast %7 : vector<8x128xbf16> to vector<1x8x128xbf16>
    tpu.vector_store %arg9[%c0_6, %c0_7, %c0_8], %10 {strides = array<i32>} : memref<1x8x128xbf16, #tpu.memory_space<vmem>>, vector<1x8x128xbf16>,
    %c0_9 = arith.constant 0 : index
    %c0_10 = arith.constant 0 : index
    %11 = vector.load %arg4[%c0_9, %c0_10] : memref<32x128xbf16, #tpu.memory_space<vmem>>, vector<32x128xbf16>
    %cst_11 = arith.constant dense<0.000000e+00> : vector<8x128xf32>
    %12 = tpu.matmul %1, %11, %cst_11 {dimension_numbers = #tpu.dot_dimension_numbers<[1], [0], [0], [1], [0, 0, 1, 1], [], []>} : vector<8x32xbf16>, vector<32x128xbf16>, vector<8x128xf32> -> vector<8x128xf32>
    %c0_12 = arith.constant 0 : index
    %c0_13 = arith.constant 0 : index
    %13 = vector.load %arg7[%c0_12, %c0_13] : memref<1x128xf32, #tpu.memory_space<vmem>>, vector<1x128xf32>
    %14 = vector.broadcast %13 : vector<1x128xf32> to vector<8x128xf32>
    %15 = arith.addf %12, %14 : vector<8x128xf32>
    %16 = arith.truncf %15 : vector<8x128xf32> to vector<8x128xbf16>
    %c0_14 = arith.constant 0 : index
    %c0_15 = arith.constant 0 : index
    %c0_16 = arith.constant 0 : index
    %17 = vector.load %arg10[%c0_14, %c0_15, %c0_16] : memref<1x8x128xbf16, #tpu.memory_space<vmem>>, vector<1x8x128xbf16>
    %18 = vector.shape_cast %17 : vector<1x8x128xbf16> to vector<8x128xbf16>
    %19 = vector.shape_cast %16 : vector<8x128xbf16> to vector<1x8x128xbf16>
    tpu.vector_store %arg10[%c0_14, %c0_15, %c0_16], %19 {strides = array<i32>} : memref<1x8x128xbf16, #tpu.memory_space<vmem>>, vector<1x8x128xbf16>,
    %c0_17 = arith.constant 0 : index
    %c0_18 = arith.constant 0 : index
    %20 = vector.load %arg5[%c0_17, %c0_18] : memref<32x128xbf16, #tpu.memory_space<vmem>>, vector<32x128xbf16>
    %cst_19 = arith.constant dense<0.000000e+00> : vector<8x128xf32>
    %21 = tpu.matmul %1, %20, %cst_19 {dimension_numbers = #tpu.dot_dimension_numbers<[1], [0], [0], [1], [0, 0, 1, 1], [], []>} : vector<8x32xbf16>, vector<32x128xbf16>, vector<8x128xf32> -> vector<8x128xf32>
    %c0_20 = arith.constant 0 : index
    %c0_21 = arith.constant 0 : index
    %22 = vector.load %arg8[%c0_20, %c0_21] : memref<1x128xf32, #tpu.memory_space<vmem>>, vector<1x128xf32>
    %23 = vector.broadcast %22 : vector<1x128xf32> to vector<8x128xf32>
    %24 = arith.addf %21, %23 : vector<8x128xf32>
    %25 = arith.truncf %24 : vector<8x128xf32> to vector<8x128xbf16>
    %c0_22 = arith.constant 0 : index
    %c0_23 = arith.constant 0 : index
    %c0_24 = arith.constant 0 : index
    %26 = vector.load %arg11[%c0_22, %c0_23, %c0_24] : memref<1x8x128xbf16, #tpu.memory_space<vmem>>, vector<1x8x128xbf16>
    %27 = vector.shape_cast %26 : vector<1x8x128xbf16> to vector<8x128xbf16>
    %28 = vector.shape_cast %25 : vector<8x128xbf16> to vector<1x8x128xbf16>
    tpu.vector_store %arg11[%c0_22, %c0_23, %c0_24], %28 {strides = array<i32>} : memref<1x8x128xbf16, #tpu.memory_space<vmem>>, vector<1x8x128xbf16>,
    return
  }
  func.func @transform_0(%arg0: i32, %arg1: i32) -> (i32, i32, i32) {
    %c0_i32 = arith.constant 0 : i32
    %c0_i32_0 = arith.constant 0 : i32
    return %arg0, %arg1, %c0_i32 : i32, i32, i32
  }
  func.func @transform_1(%arg0: i32, %arg1: i32) -> (i32, i32) {
    %c0_i32 = arith.constant 0 : i32
    %c0_i32_0 = arith.constant 0 : i32
    %c0_i32_1 = arith.constant 0 : i32
    return %c0_i32, %c0_i32_0 : i32, i32
  }
  func.func @transform_2(%arg0: i32, %arg1: i32) -> (i32, i32) {
    %c0_i32 = arith.constant 0 : i32
    %c0_i32_0 = arith.constant 0 : i32
    %c0_i32_1 = arith.constant 0 : i32
    return %c0_i32, %c0_i32_0 : i32, i32
  }
  func.func @transform_3(%arg0: i32, %arg1: i32) -> (i32, i32) {
    %c0_i32 = arith.constant 0 : i32
    %c0_i32_0 = arith.constant 0 : i32
    %c0_i32_1 = arith.constant 0 : i32
    return %c0_i32, %c0_i32_0 : i32, i32
  }
  func.func @transform_4(%arg0: i32, %arg1: i32) -> (i32, i32) {
    %c0_i32 = arith.constant 0 : i32
    %c0_i32_0 = arith.constant 0 : i32
    %c0_i32_1 = arith.constant 0 : i32
    return %c0_i32, %c0_i32_0 : i32, i32
  }
  func.func @transform_5(%arg0: i32, %arg1: i32) -> (i32, i32) {
    %c0_i32 = arith.constant 0 : i32
    %c0_i32_0 = arith.constant 0 : i32
    %c0_i32_1 = arith.constant 0 : i32
    return %c0_i32, %c0_i32_0 : i32, i32
  }
  func.func @transform_6(%arg0: i32, %arg1: i32) -> (i32, i32) {
    %c0_i32 = arith.constant 0 : i32
    %c0_i32_0 = arith.constant 0 : i32
    %c0_i32_1 = arith.constant 0 : i32
    return %c0_i32, %c0_i32_0 : i32, i32
  }
  func.func @transform_7(%arg0: i32, %arg1: i32) -> (i32, i32, i32) {
    %c0_i32 = arith.constant 0 : i32
    %c0_i32_0 = arith.constant 0 : i32
    return %arg0, %arg1, %c0_i32 : i32, i32, i32
  }
  func.func @transform_8(%arg0: i32, %arg1: i32) -> (i32, i32, i32) {
    %c0_i32 = arith.constant 0 : i32
    %c0_i32_0 = arith.constant 0 : i32
    return %arg0, %arg1, %c0_i32 : i32, i32, i32
  }
  func.func @transform_9(%arg0: i32, %arg1: i32) -> (i32, i32, i32) {
    %c0_i32 = arith.constant 0 : i32
    %c0_i32_0 = arith.constant 0 : i32
    return %arg0, %arg1, %c0_i32 : i32, i32, i32
  }
}

</mosaic_0001>

<llo_original>
// kernel: tpu_custom_call.1
$region0: #{tpu_custom_call.1}
  #allocation0 [shape = 'u32[]', space=smem, size = 0x4, offset = 0x4, fixed_abs, tag = 'smem constant byte address 0x4 - core index']
  #allocation1 [shape = 'u32[144,128]{1,0:T(1,128)}', space=vmem, size = 0x12000, scoped, tag = 'internal scratch']
  %s0 = inlined_call_operand.hbm [shape: bf16[2,8,32], index: 0, kind: input, shape index: {}]
  %s1 = inlined_call_operand.hbm [shape: bf16[32,128], index: 1, kind: input, shape index: {}]
  %s2 = inlined_call_operand.hbm [shape: bf16[32,128], index: 2, kind: input, shape index: {}]
  %s3 = inlined_call_operand.hbm [shape: bf16[32,128], index: 3, kind: input, shape index: {}]
  %s4 = inlined_call_operand.vmem [shape: f32[1,128], index: 4, kind: input, shape index: {}]
  %s5 = inlined_call_operand.vmem [shape: f32[1,128], index: 5, kind: input, shape index: {}]
  %s6 = inlined_call_operand.vmem [shape: f32[1,128], index: 6, kind: input, shape index: {}]
  %s7 = inlined_call_operand.hbm [shape: bf16[2,8,128], index: 7, kind: output, shape index: {0}]
  %s8 = inlined_call_operand.hbm [shape: bf16[2,8,128], index: 8, kind: output, shape index: {1}]
  %s9 = inlined_call_operand.hbm [shape: bf16[2,8,128], index: 9, kind: output, shape index: {2}]
  %10 = xla_tuple %s7, %s8, %s9
  %s11 = sld [smem:[#allocation0]]
  $region93: #{tpu_custom_call.1} parent=0
    _
  %s13 = ssub.s32 1, %s11
  %s14 = scalar_select 0, %s13, %s11
  $region1: #{tpu_custom_call.1} parent=0
    #allocation2 [shape = 'u8[4096]{0}', space=vmem, size = 0x1000, scoped, tag = 'input window, operand 0']
    #allocation3 [shape = 's32[2]{0}', space=sflag, size = 0x8, scoped, tag = 'scoped memory for tpu_custom_call.1']
    #allocation4 [shape = 's32[2]{0}', space=sflag, size = 0x8, scoped, tag = 'scoped memory for tpu_custom_call.1']
    #allocation5 [shape = 'u8[8192]{0}', space=vmem, size = 0x2000, scoped, tag = 'input window, operand 1, single buffered']
    #allocation6 [shape = 's32[1]{0}', space=sflag, size = 0x4, scoped, tag = 'scoped memory for tpu_custom_call.1']
    #allocation7 [shape = 'u8[8192]{0}', space=vmem, size = 0x2000, scoped, tag = 'input window, operand 2, single buffered']
    #allocation8 [shape = 'u8[8192]{0}', space=vmem, size = 0x2000, scoped, tag = 'input window, operand 3, single buffered']
    #allocation9 [shape = 's32[1]{0}', space=sflag, size = 0x4, scoped, tag = 'scoped memory for tpu_custom_call.1']
    #allocation10 [shape = 'u8[4096]{0}', space=vmem, size = 0x1000, scoped, tag = 'output window, operand 0']
    #allocation11 [shape = 'u8[4096]{0}', space=vmem, size = 0x1000, scoped, tag = 'output window, operand 1']
    #allocation12 [shape = 's32[2]{0}', space=sflag, size = 0x8, scoped, tag = 'scoped memory for tpu_custom_call.1']
    #allocation13 [shape = 'u8[4096]{0}', space=vmem, size = 0x1000, scoped, tag = 'output window, operand 2']
    %15 = vsyncpa [#allocation3], 0
    %s16 = scalar_lea.sflag [#allocation3], 1
    %17 = vsyncpa %s16, 0
    %18 = vsyncpa [#allocation6], 0
    %19 = vsyncpa [#allocation9], 0
    %20 = vsyncpa [#allocation4], 0
    %s21 = scalar_lea.sflag [#allocation4], 1
    %22 = vsyncpa %s21, 0
    %23 = vsyncpa [#allocation12], 0
    %s24 = scalar_lea.sflag [#allocation12], 1
    %25 = vsyncpa %s24, 0
    loop: start=0, step=1, limit=4
    $region2: #{tpu_custom_call.1} parent=1 // loop_pre_header
      _
    $region3: #{tpu_custom_call.1} parent=1 // loop_header
      %s27 = sphi 0, %s31
      %p28 = scmp.ge.s32.totalorder %s27, 4
      %s34 = sphi 0, %s46
      %s35 = sphi 0, %s42
      %s36 = sphi 0, %s34
      %s37 = sphi 0, %s35
      %s38 = sphi 0, %s36
      %s39 = sphi 0, %s37
      %s51 = sphi 0, %s53
      %s54 = sphi 0, %s51
      %s55 = sphi 0, %s54
      %s71 = sphi 0, %s55
      %s75 = sphi 0, %s75
      %s77 = sphi 0, %s75
      %s78 = sphi 0, %s77
      %s92 = sphi 0, %s78
      %s96 = sphi 0, %s96
      %s98 = sphi 0, %s96
      %s99 = sphi 0, %s98
      %s113 = sphi 0, %s99
      %s117 = sphi 0, %s117
      %s119 = sphi 0, %s117
      %s120 = sphi 0, %s119
      %s134 = sphi 0, %s120
      %s138 = sphi 0, %s138
      %s140 = sphi 0, %s138
      %s141 = sphi 0, %s140
      %s155 = sphi 0, %s141
      %s159 = sphi 0, %s159
      %s161 = sphi 0, %s159
      %s162 = sphi 0, %s161
      %s176 = sphi 0, %s162
      %s180 = sphi 0, %s180
      %s182 = sphi 0, %s180
      %s183 = sphi 0, %s182
      %s197 = sphi 0, %s183
      %s205 = sphi 0, %s207
      %s208 = sphi 0, %s205
      %s209 = sphi 0, %s208
      %s225 = sphi 0, %s209
      %s233 = sphi 0, %s235
      %s236 = sphi 0, %s233
      %s237 = sphi 0, %s236
      %s253 = sphi 0, %s237
      %s261 = sphi 0, %s263
      %s264 = sphi 0, %s261
      %s265 = sphi 0, %s264
      %s281 = sphi 0, %s265
    $region4: #{tpu_custom_call.1} parent=1 // loop_header_branch
      %30 = sbr.rel (%p28) target = $region8
    $region5: #{tpu_custom_call.1} parent=1 // loop_body
      %s32 = ssub.s32 %s27, 1
      %s33 = ssub.s32 %s27, 2
      %s40 = sadd.s32 1, %s35
      %p41 = scmp.ge.s32.totalorder %s40, 1
      %s42 = scalar_select %p41, 0, %s40
      %s43 = sadd.s32 1, %s34
      %s44 = scalar_select %p41, %s43, %s34
      %p45 = scmp.ge.s32.totalorder %s44, 2
      %s46 = scalar_select %p45, 0, %s44
      %s47 = ssub.s32 %s34, %s46
      %s48 = ssub.s32 %s35, %s42
      %s49 = sor.u32 %s47, %s48
      %p50 = scmp.eq.s32.totalorder %s49, 0
      %s52 = sadd.s32 %s51, 1
      %s53 = scalar_select %p50, %s51, %s52
      %p56 = pneg %p50
      %p57 = scmp.eq.s32.totalorder %s27, 1
      %p58 = por %p56, %p57
      %p59 = scmp.ne.s32.totalorder %s51, %s54
      %p60 = scmp.eq.s32.totalorder %s27, 0
      %p61 = por %p59, %p60
      %p62 = scmp.ne.s32.totalorder %s51, %s54
      %p63 = scmp.eq.s32.totalorder %s32, 1
      %p64 = por %p62, %p63
      %p65 = scmp.ne.s32.totalorder %s54, %s55
      %p66 = scmp.eq.s32.totalorder %s32, 0
      %p67 = por %p65, %p66
      %p68 = scmp.ne.s32.totalorder %s54, %s55
      %p69 = scmp.eq.s32.totalorder %s33, 1
      %p70 = por %p68, %p69
      %p72 = scmp.ne.s32.totalorder %s55, %s71
      %p73 = scmp.eq.s32.totalorder %s33, 0
      %p74 = por %p72, %p73
      %s76 = sadd.s32 %s75, 1
      %p79 = scmp.eq.s32.totalorder %s27, 1
      %p80 = scmp.ne.s32.totalorder %s75, %s77
      %p81 = scmp.eq.s32.totalorder %s27, 0
      %p82 = por %p80, %p81
      %p83 = scmp.ne.s32.totalorder %s75, %s77
      %p84 = scmp.eq.s32.totalorder %s32, 1
      %p85 = por %p83, %p84
      %p86 = scmp.ne.s32.totalorder %s77, %s78
      %p87 = scmp.eq.s32.totalorder %s32, 0
      %p88 = por %p86, %p87
      %p89 = scmp.ne.s32.totalorder %s77, %s78
      %p90 = scmp.eq.s32.totalorder %s33, 1
      %p91 = por %p89, %p90
      %p93 = scmp.ne.s32.totalorder %s78, %s92
      %p94 = scmp.eq.s32.totalorder %s33, 0
      %p95 = por %p93, %p94
      %s97 = sadd.s32 %s96, 1
      %p100 = scmp.eq.s32.totalorder %s27, 1
      %p101 = scmp.ne.s32.totalorder %s96, %s98
      %p102 = scmp.eq.s32.totalorder %s27, 0
      %p103 = por %p101, %p102
      %p104 = scmp.ne.s32.totalorder %s96, %s98
      %p105 = scmp.eq.s32.totalorder %s32, 1
      %p106 = por %p104, %p105
      %p107 = scmp.ne.s32.totalorder %s98, %s99
      %p108 = scmp.eq.s32.totalorder %s32, 0
      %p109 = por %p107, %p108
      %p110 = scmp.ne.s32.totalorder %s98, %s99
      %p111 = scmp.eq.s32.totalorder %s33, 1
      %p112 = por %p110, %p111
      %p114 = scmp.ne.s32.totalorder %s99, %s113
      %p115 = scmp.eq.s32.totalorder %s33, 0
      %p116 = por %p114, %p115
      %s118 = sadd.s32 %s117, 1
      %p121 = scmp.eq.s32.totalorder %s27, 1
      %p122 = scmp.ne.s32.totalorder %s117, %s119
      %p123 = scmp.eq.s32.totalorder %s27, 0
      %p124 = por %p122, %p123
      %p125 = scmp.ne.s32.totalorder %s117, %s119
      %p126 = scmp.eq.s32.totalorder %s32, 1
      %p127 = por %p125, %p126
      %p128 = scmp.ne.s32.totalorder %s119, %s120
      %p129 = scmp.eq.s32.totalorder %s32, 0
      %p130 = por %p128, %p129
      %p131 = scmp.ne.s32.totalorder %s119, %s120
      %p132 = scmp.eq.s32.totalorder %s33, 1
      %p133 = por %p131, %p132
      %p135 = scmp.ne.s32.totalorder %s120, %s134
      %p136 = scmp.eq.s32.totalorder %s33, 0
      %p137 = por %p135, %p136
      %s139 = sadd.s32 %s138, 1
      %p142 = scmp.eq.s32.totalorder %s27, 1
      %p143 = scmp.ne.s32.totalorder %s138, %s140
      %p144 = scmp.eq.s32.totalorder %s27, 0
      %p145 = por %p143, %p144
      %p146 = scmp.ne.s32.totalorder %s138, %s140
      %p147 = scmp.eq.s32.totalorder %s32, 1
      %p148 = por %p146, %p147
      %p149 = scmp.ne.s32.totalorder %s140, %s141
      %p150 = scmp.eq.s32.totalorder %s32, 0
      %p151 = por %p149, %p150
      %p152 = scmp.ne.s32.totalorder %s140, %s141
      %p153 = scmp.eq.s32.totalorder %s33, 1
      %p154 = por %p152, %p153
      %p156 = scmp.ne.s32.totalorder %s141, %s155
      %p157 = scmp.eq.s32.totalorder %s33, 0
      %p158 = por %p156, %p157
      %s160 = sadd.s32 %s159, 1
      %p163 = scmp.eq.s32.totalorder %s27, 1
      %p164 = scmp.ne.s32.totalorder %s159, %s161
      %p165 = scmp.eq.s32.totalorder %s27, 0
      %p166 = por %p164, %p165
      %p167 = scmp.ne.s32.totalorder %s159, %s161
      %p168 = scmp.eq.s32.totalorder %s32, 1
      %p169 = por %p167, %p168
      %p170 = scmp.ne.s32.totalorder %s161, %s162
      %p171 = scmp.eq.s32.totalorder %s32, 0
      %p172 = por %p170, %p171
      %p173 = scmp.ne.s32.totalorder %s161, %s162
      %p174 = scmp.eq.s32.totalorder %s33, 1
      %p175 = por %p173, %p174
      %p177 = scmp.ne.s32.totalorder %s162, %s176
      %p178 = scmp.eq.s32.totalorder %s33, 0
      %p179 = por %p177, %p178
      %s181 = sadd.s32 %s180, 1
      %p184 = scmp.eq.s32.totalorder %s27, 1
      %p185 = scmp.ne.s32.totalorder %s180, %s182
      %p186 = scmp.eq.s32.totalorder %s27, 0
      %p187 = por %p185, %p186
      %p188 = scmp.ne.s32.totalorder %s180, %s182
      %p189 = scmp.eq.s32.totalorder %s32, 1
      %p190 = por %p188, %p189
      %p191 = scmp.ne.s32.totalorder %s182, %s183
      %p192 = scmp.eq.s32.totalorder %s32, 0
      %p193 = por %p191, %p192
      %p194 = scmp.ne.s32.totalorder %s182, %s183
      %p195 = scmp.eq.s32.totalorder %s33, 1
      %p196 = por %p194, %p195
      %p198 = scmp.ne.s32.totalorder %s183, %s197
      %p199 = scmp.eq.s32.totalorder %s33, 0
      %p200 = por %p198, %p199
      %s201 = ssub.s32 %s34, %s46
      %s202 = ssub.s32 %s35, %s42
      %s203 = sor.u32 %s201, %s202
      %p204 = scmp.eq.s32.totalorder %s203, 0
      %s206 = sadd.s32 %s205, 1
      %s207 = scalar_select %p204, %s205, %s206
      %p210 = pneg %p204
      %p211 = scmp.eq.s32.totalorder %s27, 1
      %p212 = por %p210, %p211
      %p213 = scmp.ne.s32.totalorder %s205, %s208
      %p214 = scmp.eq.s32.totalorder %s27, 0
      %p215 = por %p213, %p214
      %p216 = scmp.ne.s32.totalorder %s205, %s208
      %p217 = scmp.eq.s32.totalorder %s32, 1
      %p218 = por %p216, %p217
      %p219 = scmp.ne.s32.totalorder %s208, %s209
      %p220 = scmp.eq.s32.totalorder %s32, 0
      %p221 = por %p219, %p220
      %p222 = scmp.ne.s32.totalorder %s208, %s209
      %p223 = scmp.eq.s32.totalorder %s33, 1
      %p224 = por %p222, %p223
      %p226 = scmp.ne.s32.totalorder %s209, %s225
      %p227 = scmp.eq.s32.totalorder %s33, 0
      %p228 = por %p226, %p227
      %s229 = ssub.s32 %s34, %s46
      %s230 = ssub.s32 %s35, %s42
      %s231 = sor.u32 %s229, %s230
      %p232 = scmp.eq.s32.totalorder %s231, 0
      %s234 = sadd.s32 %s233, 1
      %s235 = scalar_select %p232, %s233, %s234
      %p238 = pneg %p232
      %p239 = scmp.eq.s32.totalorder %s27, 1
      %p240 = por %p238, %p239
      %p241 = scmp.ne.s32.totalorder %s233, %s236
      %p242 = scmp.eq.s32.totalorder %s27, 0
      %p243 = por %p241, %p242
      %p244 = scmp.ne.s32.totalorder %s233, %s236
      %p245 = scmp.eq.s32.totalorder %s32, 1
      %p246 = por %p244, %p245
      %p247 = scmp.ne.s32.totalorder %s236, %s237
      %p248 = scmp.eq.s32.totalorder %s32, 0
      %p249 = por %p247, %p248
      %p250 = scmp.ne.s32.totalorder %s236, %s237
      %p251 = scmp.eq.s32.totalorder %s33, 1
      %p252 = por %p250, %p251
      %p254 = scmp.ne.s32.totalorder %s237, %s253
      %p255 = scmp.eq.s32.totalorder %s33, 0
      %p256 = por %p254, %p255
      %s257 = ssub.s32 %s34, %s46
      %s258 = ssub.s32 %s35, %s42
      %s259 = sor.u32 %s257, %s258
      %p260 = scmp.eq.s32.totalorder %s259, 0
      %s262 = sadd.s32 %s261, 1
      %s263 = scalar_select %p260, %s261, %s262
      %p266 = pneg %p260
      %p267 = scmp.eq.s32.totalorder %s27, 1
      %p268 = por %p266, %p267
      %p269 = scmp.ne.s32.totalorder %s261, %s264
      %p270 = scmp.eq.s32.totalorder %s27, 0
      %p271 = por %p269, %p270
      %p272 = scmp.ne.s32.totalorder %s261, %s264
      %p273 = scmp.eq.s32.totalorder %s32, 1
      %p274 = por %p272, %p273
      %p275 = scmp.ne.s32.totalorder %s264, %s265
      %p276 = scmp.eq.s32.totalorder %s32, 0
      %p277 = por %p275, %p276
      %p278 = scmp.ne.s32.totalorder %s264, %s265
      %p279 = scmp.eq.s32.totalorder %s33, 1
      %p280 = por %p278, %p279
      %p282 = scmp.ne.s32.totalorder %s265, %s281
      %p283 = scmp.eq.s32.totalorder %s33, 0
      %p284 = por %p282, %p283
      %p285 = scmp.le.s32.totalorder 1, %s27
      %p286 = scmp.lt.s32.totalorder %s27, 3
      %p287 = pnand %p285, %p286
      %p288 = pneg %p287
      // Predicated region
      $region9: #{tpu_custom_call.1} parent=5 // pred_check
        _
      $region10: #{tpu_custom_call.1} parent=5 // pred_check_branch
        %290 = sbr.rel (%p287) target = $region12
      $region11: #{tpu_custom_call.1} parent=5 // pred_region
        %s291 = ssub.s32 %s27, 1
        // Predicated region
        $region13: #{tpu_custom_call.1} parent=11 // pred_check
          %p292 = pneg %p88
        $region14: #{tpu_custom_call.1} parent=11 // pred_check_branch
          %294 = sbr.rel (%p292) target = $region16
        $region15: #{tpu_custom_call.1} parent=11 // pred_region
          %s296 = ssub.s32 256, 256
          %297 = vsyncadd [#allocation6], %s296
          %s298 = sshll.u32 [#allocation5], 4
          %s299 = int_to_ptr.vmem [resolvable:$true] %s298
          %304 = dma.hbm_to_vmem [thread:$0]  %s1, 256, %s299, [#allocation6], 64, 64, 4
        $region16: #{tpu_custom_call.1} parent=11 // pred_fallthru
          _
        // Predicated region
        $region17: #{tpu_custom_call.1} parent=11 // pred_check
          %p305 = pneg %p109
        $region18: #{tpu_custom_call.1} parent=11 // pred_check_branch
          %307 = sbr.rel (%p305) target = $region20
        $region19: #{tpu_custom_call.1} parent=11 // pred_region
          %s309 = ssub.s32 256, 256
          %310 = vsyncadd [#allocation6], %s309
          %s311 = sshll.u32 [#allocation7], 4
          %s312 = int_to_ptr.vmem [resolvable:$true] %s311
          %317 = dma.hbm_to_vmem [thread:$0]  %s2, 256, %s312, [#allocation6], 64, 64, 4
        $region20: #{tpu_custom_call.1} parent=11 // pred_fallthru
          _
        // Predicated region
        $region21: #{tpu_custom_call.1} parent=11 // pred_check
          %p318 = pneg %p130
        $region22: #{tpu_custom_call.1} parent=11 // pred_check_branch
          %320 = sbr.rel (%p318) target = $region24
        $region23: #{tpu_custom_call.1} parent=11 // pred_region
          %s322 = ssub.s32 256, 256
          %323 = vsyncadd [#allocation9], %s322
          %s324 = sshll.u32 [#allocation8], 4
          %s325 = int_to_ptr.vmem [resolvable:$true] %s324
          %330 = dma.hbm_to_vmem [thread:$0]  %s3, 256, %s325, [#allocation9], 64, 64, 4
        $region24: #{tpu_custom_call.1} parent=11 // pred_fallthru
          _
        // Predicated region
        $region25: #{tpu_custom_call.1} parent=11 // pred_check
          %p331 = pneg %p151
        $region26: #{tpu_custom_call.1} parent=11 // pred_check_branch
          %333 = sbr.rel (%p331) target = $region28
        $region27: #{tpu_custom_call.1} parent=11 // pred_region
          _
        $region28: #{tpu_custom_call.1} parent=11 // pred_fallthru
          _
        // Predicated region
        $region29: #{tpu_custom_call.1} parent=11 // pred_check
          %p334 = pneg %p172
        $region30: #{tpu_custom_call.1} parent=11 // pred_check_branch
          %336 = sbr.rel (%p334) target = $region32
        $region31: #{tpu_custom_call.1} parent=11 // pred_region
          _
        $region32: #{tpu_custom_call.1} parent=11 // pred_fallthru
          _
        // Predicated region
        $region33: #{tpu_custom_call.1} parent=11 // pred_check
          %p337 = pneg %p193
        $region34: #{tpu_custom_call.1} parent=11 // pred_check_branch
          %339 = sbr.rel (%p337) target = $region36
        $region35: #{tpu_custom_call.1} parent=11 // pred_region
          _
        $region36: #{tpu_custom_call.1} parent=11 // pred_fallthru
          _
      $region12: #{tpu_custom_call.1} parent=5 // pred_fallthru
        _
      %p340 = scmp.lt.s32.totalorder %s27, 2
      // Predicated region
      $region37: #{tpu_custom_call.1} parent=5 // pred_check
        %p341 = pneg %p340
      $region38: #{tpu_custom_call.1} parent=5 // pred_check_branch
        %343 = sbr.rel (%p341) target = $region40
      $region39: #{tpu_custom_call.1} parent=5 // pred_region
        // Predicated region
        $region41: #{tpu_custom_call.1} parent=39 // pred_check
          %p344 = pneg %p61
        $region42: #{tpu_custom_call.1} parent=39 // pred_check_branch
          %346 = sbr.rel (%p344) target = $region44
        $region43: #{tpu_custom_call.1} parent=39 // pred_region
          %s347 = sand.u32 %s51, 1
          %s348 = scalar_lea.sflag [#allocation3], %s347
          %s349 = sand.u32 %s51, 1
          %s350 = smul.addr %s349, 4
          %s351 = scalar_lea.vmem [#allocation2], %s350
          %s353 = ssub.s32 64, 64
          %354 = vsyncadd %s348, %s353
          %s355 = sadd.s32 %s35, %s34
          %s356 = smul.addr %s355, 64
          %s357 = scalar_lea.hbm %s0, %s356
          %s359 = sshll.u32 %s351, 4
          %s360 = int_to_ptr.vmem [resolvable:$true] %s359
          %362 = dma.hbm_to_vmem [thread:$0]  %s357, 64, %s360, %s348
        $region44: #{tpu_custom_call.1} parent=39 // pred_fallthru
          _
      $region40: #{tpu_custom_call.1} parent=5 // pred_fallthru
        _
      %p363 = scmp.le.s32.totalorder 1, %s27
      %p364 = scmp.lt.s32.totalorder %s27, 3
      %p365 = pnand %p363, %p364
      %p366 = pneg %p365
      // Predicated region
      $region45: #{tpu_custom_call.1} parent=5 // pred_check
        _
      $region46: #{tpu_custom_call.1} parent=5 // pred_check_branch
        %368 = sbr.rel (%p365) target = $region48
      $region47: #{tpu_custom_call.1} parent=5 // pred_region
        %s369 = ssub.s32 %s27, 1
        %s370 = sand.u32 %s54, 1
        %s371 = scalar_lea.sflag [#allocation3], %s370
        %s372 = sand.u32 %s54, 1
        %s373 = smul.addr %s372, 4
        %s374 = scalar_lea.vmem [#allocation2], %s373
        // Predicated region
        $region49: #{tpu_custom_call.1} parent=47 // pred_check
          %p375 = pneg %p67
        $region50: #{tpu_custom_call.1} parent=47 // pred_check_branch
          %377 = sbr.rel (%p375) target = $region52
        $region51: #{tpu_custom_call.1} parent=47 // pred_region
          %378 = dma.done %s371, 64
        $region52: #{tpu_custom_call.1} parent=47 // pred_fallthru
          _
        // Predicated region
        $region53: #{tpu_custom_call.1} parent=47 // pred_check
          %p379 = pneg %p88
        $region54: #{tpu_custom_call.1} parent=47 // pred_check_branch
          %381 = sbr.rel (%p379) target = $region56
        $region55: #{tpu_custom_call.1} parent=47 // pred_region
          %382 = dma.done [#allocation6], 256
        $region56: #{tpu_custom_call.1} parent=47 // pred_fallthru
          _
        // Predicated region
        $region57: #{tpu_custom_call.1} parent=47 // pred_check
          %p383 = pneg %p109
        $region58: #{tpu_custom_call.1} parent=47 // pred_check_branch
          %385 = sbr.rel (%p383) target = $region60
        $region59: #{tpu_custom_call.1} parent=47 // pred_region
          %386 = dma.done [#allocation6], 256
        $region60: #{tpu_custom_call.1} parent=47 // pred_fallthru
          _
        // Predicated region
        $region61: #{tpu_custom_call.1} parent=47 // pred_check
          %p387 = pneg %p130
        $region62: #{tpu_custom_call.1} parent=47 // pred_check_branch
          %389 = sbr.rel (%p387) target = $region64
        $region63: #{tpu_custom_call.1} parent=47 // pred_region
          %390 = dma.done [#allocation9], 256
        $region64: #{tpu_custom_call.1} parent=47 // pred_fallthru
          _
        %s391 = sand.u32 %s54, 1
        %s392 = scalar_lea.sflag [#allocation3], %s391
        %s393 = sand.u32 %s54, 1
        %s394 = smul.addr %s393, 4
        %s395 = scalar_lea.vmem [#allocation2], %s394
        %p396 = pneg %p67
        %p397 = pneg %p64
        %p398 = pneg %p88
        %p399 = pneg %p85
        %p400 = pneg %p109
        %p401 = pneg %p106
        %p402 = pneg %p130
        %p403 = pneg %p127
        %p404 = pneg %p151
        %p405 = pneg %p148
        %p406 = pneg %p172
        %p407 = pneg %p169
        %p408 = pneg %p193
        %p409 = pneg %p190
        %p410 = pneg %p221
        %p411 = pneg %p218
        %s412 = sand.u32 %s208, 1
        %s413 = scalar_lea.sflag [#allocation4], %s412
        %s414 = sand.u32 %s208, 1
        %s415 = smul.addr %s414, 4
        %s416 = scalar_lea.vmem [#allocation10], %s415
        %p417 = pneg %p249
        %p418 = pneg %p246
        %s419 = sand.u32 %s32, 1
        %s420 = scalar_lea.sflag [#allocation12], %s419
        %s421 = sand.u32 %s236, 1
        %s422 = smul.addr %s421, 4
        %s423 = scalar_lea.vmem [#allocation11], %s422
        %p424 = pneg %p277
        %p425 = pneg %p274
        %s426 = sand.u32 %s32, 1
        %s427 = scalar_lea.sflag [#allocation12], %s426
        %s428 = sand.u32 %s264, 1
        %s429 = smul.addr %s428, 4
        %s430 = scalar_lea.vmem [#allocation13], %s429
        %v432 = vld [vmem:[%s374] sm:$0xf]
        %v433 = vld [vmem:[#allocation5] sm:$0xf]
        %v434 = vld [vmem:[#allocation5 + $0x4] sm:$0xf]
        %v435 = vld [vmem:[#allocation5 + $0x8] sm:$0xf]
        %v436 = vld [vmem:[#allocation5 + $0xc] sm:$0xf]
        %v437 = vld [vmem:[%s4] sm:$0x1]
        %v439 = vlaneseq
        %v440 = vshrl.u32 %v439, 7
        %v441 = vsub.s32 0, %v440
        %v442 = vrot.slane %v437, %v441
        %v448 = vunpack.c.l.b16 %v433
        %v449 = vunpack.c.l.b16 %v434
        %v450 = vunpack.c.l.b16 %v435
        %v451 = vunpack.c.l.b16 %v436
        %v452 = vpack.c.b16 %v449, %v448
        %v453 = vpack.c.b16 %v451, %v450
        %vm456 = vcmask 261120
        %v458 = vsel %vm456, %v432, 0
        %460 = vmatprep.subr.bf16.mxu0 0
        %461 = vmatpush1.bf16.msra.mxu0 %v452
        %462 = vmatprep.subr.bf16.mxu0 0
        %463 = vmatpush1.bf16.msra.mxu0 %v453
        %464 = vmatprep.subr.bf16.mxu0 0
        %465 = vmatpush1.bf16.msra.mxu0 0
        %466 = vmatprep.subr.bf16.mxu0 0
        %467 = vmatpush1.bf16.msra.mxu0 0
        %468 = vmatprep.subr.bf16.mxu0 0
        %469 = vmatpush1.bf16.msra.mxu0 0
        %470 = vmatprep.subr.bf16.mxu0 0
        %471 = vmatpush1.bf16.msra.mxu0 0
        %472 = vmatprep.subr.bf16.mxu0 0
        %473 = vmatpush1.bf16.msra.mxu0 0
        %474 = vmatprep.subr.bf16.mxu0 0
        %475 = vmatpush1.bf16.msra.mxu0 0
        %476 = vmatprep.subr.bf16.mxu0 0
        %477 = vmatpush1.bf16.msra.mxu0 0
        %478 = vmatprep.subr.bf16.mxu0 0
        %479 = vmatpush1.bf16.msra.mxu0 0
        %480 = vmatprep.subr.bf16.mxu0 0
        %481 = vmatpush1.bf16.msra.mxu0 0
        %482 = vmatprep.subr.bf16.mxu0 0
        %483 = vmatpush1.bf16.msra.mxu0 0
        %484 = vmatprep.subr.bf16.mxu0 0
        %485 = vmatpush1.bf16.msra.mxu0 0
        %486 = vmatprep.subr.bf16.mxu0 0
        %487 = vmatpush1.bf16.msra.mxu0 0
        %488 = vmatprep.subr.bf16.mxu0 0
        %489 = vmatpush1.bf16.msra.mxu0 0
        %490 = vmatprep.subr.bf16.mxu0 0
        %491 = vmatpush1.bf16.msra.mxu0 0
        %492 = vmatprep.mubr.bf16.mxu0 0
        %493 = vmatmul.mubr.bf16.gmra.mrb[0].mxu0 %v458
        %v494 = vpop.f32.mrb[0].mxu0
        %v495 = vadd.f32 %v442, %v494
        %v496 = vpop.f32.mrb[0].mxu0
        %v497 = vpop.f32.mrb[0].mxu0
        %v498 = vpop.f32.mrb[0].mxu0
        %499 = vdwg.mxu0
        %v500 = vpack.c.bf16 %v495, %v495
        %501 = vst [vmem:[%s416] sm:$0xf] %v500
        %v502 = vld [vmem:[#allocation7] sm:$0xf]
        %v503 = vld [vmem:[#allocation7 + $0x4] sm:$0xf]
        %v504 = vld [vmem:[#allocation7 + $0x8] sm:$0xf]
        %v505 = vld [vmem:[#allocation7 + $0xc] sm:$0xf]
        %v506 = vld [vmem:[%s5] sm:$0x1]
        %v508 = vlaneseq
        %v509 = vshrl.u32 %v508, 7
        %v510 = vsub.s32 0, %v509
        %v511 = vrot.slane %v506, %v510
        %v517 = vunpack.c.l.b16 %v502
        %v518 = vunpack.c.l.b16 %v503
        %v519 = vunpack.c.l.b16 %v504
        %v520 = vunpack.c.l.b16 %v505
        %v521 = vpack.c.b16 %v518, %v517
        %v522 = vpack.c.b16 %v520, %v519
        %525 = vmatprep.subr.bf16.mxu0 0
        %526 = vmatpush1.bf16.msra.mxu0 %v521
        %527 = vmatprep.subr.bf16.mxu0 0
        %528 = vmatpush1.bf16.msra.mxu0 %v522
        %529 = vmatprep.subr.bf16.mxu0 0
        %530 = vmatpush1.bf16.msra.mxu0 0
        %531 = vmatprep.subr.bf16.mxu0 0
        %532 = vmatpush1.bf16.msra.mxu0 0
        %533 = vmatprep.subr.bf16.mxu0 0
        %534 = vmatpush1.bf16.msra.mxu0 0
        %535 = vmatprep.subr.bf16.mxu0 0
        %536 = vmatpush1.bf16.msra.mxu0 0
        %537 = vmatprep.subr.bf16.mxu0 0
        %538 = vmatpush1.bf16.msra.mxu0 0
        %539 = vmatprep.subr.bf16.mxu0 0
        %540 = vmatpush1.bf16.msra.mxu0 0
        %541 = vmatprep.subr.bf16.mxu0 0
        %542 = vmatpush1.bf16.msra.mxu0 0
        %543 = vmatprep.subr.bf16.mxu0 0
        %544 = vmatpush1.bf16.msra.mxu0 0
        %545 = vmatprep.subr.bf16.mxu0 0
        %546 = vmatpush1.bf16.msra.mxu0 0
        %547 = vmatprep.subr.bf16.mxu0 0
        %548 = vmatpush1.bf16.msra.mxu0 0
        %549 = vmatprep.subr.bf16.mxu0 0
        %550 = vmatpush1.bf16.msra.mxu0 0
        %551 = vmatprep.subr.bf16.mxu0 0
        %552 = vmatpush1.bf16.msra.mxu0 0
        %553 = vmatprep.subr.bf16.mxu0 0
        %554 = vmatpush1.bf16.msra.mxu0 0
        %555 = vmatprep.subr.bf16.mxu0 0
        %556 = vmatpush1.bf16.msra.mxu0 0
        %557 = vmatprep.mubr.bf16.mxu0 0
        %558 = vmatmul.mubr.bf16.gmra.mrb[0].mxu0 %v458
        %v559 = vpop.f32.mrb[0].mxu0
        %v560 = vadd.f32 %v511, %v559
        %v561 = vpop.f32.mrb[0].mxu0
        %v562 = vpop.f32.mrb[0].mxu0
        %v563 = vpop.f32.mrb[0].mxu0
        %564 = vdwg.mxu0
        %v565 = vpack.c.bf16 %v560, %v560
        %566 = vst [vmem:[%s423] sm:$0xf] %v565
        %v567 = vld [vmem:[#allocation8] sm:$0xf]
        %v568 = vld [vmem:[#allocation8 + $0x4] sm:$0xf]
        %v569 = vld [vmem:[#allocation8 + $0x8] sm:$0xf]
        %v570 = vld [vmem:[#allocation8 + $0xc] sm:$0xf]
        %v571 = vld [vmem:[%s6] sm:$0x1]
        %v573 = vlaneseq
        %v574 = vshrl.u32 %v573, 7
        %v575 = vsub.s32 0, %v574
        %v576 = vrot.slane %v571, %v575
        %v582 = vunpack.c.l.b16 %v567
        %v583 = vunpack.c.l.b16 %v568
        %v584 = vunpack.c.l.b16 %v569
        %v585 = vunpack.c.l.b16 %v570
        %v586 = vpack.c.b16 %v583, %v582
        %v587 = vpack.c.b16 %v585, %v584
        %590 = vmatprep.subr.bf16.mxu0 0
        %591 = vmatpush1.bf16.msra.mxu0 %v586
        %592 = vmatprep.subr.bf16.mxu0 0
        %593 = vmatpush1.bf16.msra.mxu0 %v587
        %594 = vmatprep.subr.bf16.mxu0 0
        %595 = vmatpush1.bf16.msra.mxu0 0
        %596 = vmatprep.subr.bf16.mxu0 0
        %597 = vmatpush1.bf16.msra.mxu0 0
        %598 = vmatprep.subr.bf16.mxu0 0
        %599 = vmatpush1.bf16.msra.mxu0 0
        %600 = vmatprep.subr.bf16.mxu0 0
        %601 = vmatpush1.bf16.msra.mxu0 0
        %602 = vmatprep.subr.bf16.mxu0 0
        %603 = vmatpush1.bf16.msra.mxu0 0
        %604 = vmatprep.subr.bf16.mxu0 0
        %605 = vmatpush1.bf16.msra.mxu0 0
        %606 = vmatprep.subr.bf16.mxu0 0
        %607 = vmatpush1.bf16.msra.mxu0 0
        %608 = vmatprep.subr.bf16.mxu0 0
        %609 = vmatpush1.bf16.msra.mxu0 0
        %610 = vmatprep.subr.bf16.mxu0 0
        %611 = vmatpush1.bf16.msra.mxu0 0
        %612 = vmatprep.subr.bf16.mxu0 0
        %613 = vmatpush1.bf16.msra.mxu0 0
        %614 = vmatprep.subr.bf16.mxu0 0
        %615 = vmatpush1.bf16.msra.mxu0 0
        %616 = vmatprep.subr.bf16.mxu0 0
        %617 = vmatpush1.bf16.msra.mxu0 0
        %618 = vmatprep.subr.bf16.mxu0 0
        %619 = vmatpush1.bf16.msra.mxu0 0
        %620 = vmatprep.subr.bf16.mxu0 0
        %621 = vmatpush1.bf16.msra.mxu0 0
        %622 = vmatprep.mubr.bf16.mxu0 0
        %623 = vmatmul.mubr.bf16.gmra.mrb[0].mxu0 %v458
        %v624 = vpop.f32.mrb[0].mxu0
        %v625 = vadd.f32 %v576, %v624
        %v626 = vpop.f32.mrb[0].mxu0
        %v627 = vpop.f32.mrb[0].mxu0
        %v628 = vpop.f32.mrb[0].mxu0
        %629 = vdwg.mxu0
        %v630 = vpack.c.bf16 %v625, %v625
        %631 = vst [vmem:[%s430] sm:$0xf] %v630
        %s632 = sand.u32 %s208, 1
        %s633 = scalar_lea.sflag [#allocation4], %s632
        %s634 = sand.u32 %s208, 1
        %s635 = smul.addr %s634, 4
        %s636 = scalar_lea.vmem [#allocation10], %s635
        %s637 = sand.u32 %s32, 1
        %s638 = scalar_lea.sflag [#allocation12], %s637
        %s639 = sand.u32 %s236, 1
        %s640 = smul.addr %s639, 4
        %s641 = scalar_lea.vmem [#allocation11], %s640
        %s642 = sand.u32 %s32, 1
        %s643 = scalar_lea.sflag [#allocation12], %s642
        %s644 = sand.u32 %s264, 1
        %s645 = smul.addr %s644, 4
        %s646 = scalar_lea.vmem [#allocation13], %s645
        // Predicated region
        $region65: #{tpu_custom_call.1} parent=47 // pred_check
          %p647 = pneg %p218
        $region66: #{tpu_custom_call.1} parent=47 // pred_check_branch
          %649 = sbr.rel (%p647) target = $region68
        $region67: #{tpu_custom_call.1} parent=47 // pred_region
          %s651 = ssub.s32 64, 64
          %652 = vsyncadd %s633, %s651
          %s653 = sadd.s32 %s37, %s36
          %s654 = smul.addr %s653, 64
          %s655 = scalar_lea.hbm %s7, %s654
          %s657 = sshll.u32 %s636, 4
          %s658 = int_to_ptr.vmem [resolvable:$true] %s657
          %660 = dma.vmem_to_hbm [thread:$0]  %s658, 64, %s655, %s633
        $region68: #{tpu_custom_call.1} parent=47 // pred_fallthru
          _
        // Predicated region
        $region69: #{tpu_custom_call.1} parent=47 // pred_check
          %p661 = pneg %p246
        $region70: #{tpu_custom_call.1} parent=47 // pred_check_branch
          %663 = sbr.rel (%p661) target = $region72
        $region71: #{tpu_custom_call.1} parent=47 // pred_region
          %s665 = ssub.s32 64, 64
          %666 = vsyncadd %s638, %s665
          %s667 = sadd.s32 %s37, %s36
          %s668 = smul.addr %s667, 64
          %s669 = scalar_lea.hbm %s8, %s668
          %s671 = sshll.u32 %s641, 4
          %s672 = int_to_ptr.vmem [resolvable:$true] %s671
          %674 = dma.vmem_to_hbm [thread:$0]  %s672, 64, %s669, %s638
        $region72: #{tpu_custom_call.1} parent=47 // pred_fallthru
          _
        // Predicated region
        $region73: #{tpu_custom_call.1} parent=47 // pred_check
          %p675 = pneg %p274
        $region74: #{tpu_custom_call.1} parent=47 // pred_check_branch
          %677 = sbr.rel (%p675) target = $region76
        $region75: #{tpu_custom_call.1} parent=47 // pred_region
          %s679 = ssub.s32 64, 64
          %680 = vsyncadd %s643, %s679
          %s681 = sadd.s32 %s37, %s36
          %s682 = smul.addr %s681, 64
          %s683 = scalar_lea.hbm %s9, %s682
          %s685 = sshll.u32 %s646, 4
          %s686 = int_to_ptr.vmem [resolvable:$true] %s685
          %688 = dma.vmem_to_hbm [thread:$0]  %s686, 64, %s683, %s643
        $region76: #{tpu_custom_call.1} parent=47 // pred_fallthru
          _
      $region48: #{tpu_custom_call.1} parent=5 // pred_fallthru
        _
      %p689 = scmp.le.s32.totalorder 2, %s27
      // Predicated region
      $region77: #{tpu_custom_call.1} parent=5 // pred_check
        %p690 = pneg %p689
      $region78: #{tpu_custom_call.1} parent=5 // pred_check_branch
        %692 = sbr.rel (%p690) target = $region80
      $region79: #{tpu_custom_call.1} parent=5 // pred_region
        %s693 = ssub.s32 %s27, 2
        // Predicated region
        $region81: #{tpu_custom_call.1} parent=79 // pred_check
          %p694 = pneg %p224
        $region82: #{tpu_custom_call.1} parent=79 // pred_check_branch
          %696 = sbr.rel (%p694) target = $region84
        $region83: #{tpu_custom_call.1} parent=79 // pred_region
          %s697 = sand.u32 %s209, 1
          %s698 = scalar_lea.sflag [#allocation4], %s697
          %s699 = sand.u32 %s209, 1
          %s700 = smul.addr %s699, 4
          %s701 = scalar_lea.vmem [#allocation10], %s700
          %702 = dma.done %s698, 64
        $region84: #{tpu_custom_call.1} parent=79 // pred_fallthru
          _
        // Predicated region
        $region85: #{tpu_custom_call.1} parent=79 // pred_check
          %p703 = pneg %p252
        $region86: #{tpu_custom_call.1} parent=79 // pred_check_branch
          %705 = sbr.rel (%p703) target = $region88
        $region87: #{tpu_custom_call.1} parent=79 // pred_region
          %s706 = sand.u32 %s33, 1
          %s707 = scalar_lea.sflag [#allocation12], %s706
          %s708 = sand.u32 %s237, 1
          %s709 = smul.addr %s708, 4
          %s710 = scalar_lea.vmem [#allocation11], %s709
          %711 = dma.done %s707, 64
        $region88: #{tpu_custom_call.1} parent=79 // pred_fallthru
          _
        // Predicated region
        $region89: #{tpu_custom_call.1} parent=79 // pred_check
          %p712 = pneg %p280
        $region90: #{tpu_custom_call.1} parent=79 // pred_check_branch
          %714 = sbr.rel (%p712) target = $region92
        $region91: #{tpu_custom_call.1} parent=79 // pred_region
          %s715 = sand.u32 %s33, 1
          %s716 = scalar_lea.sflag [#allocation12], %s715
          %s717 = sand.u32 %s265, 1
          %s718 = smul.addr %s717, 4
          %s719 = scalar_lea.vmem [#allocation13], %s718
          %720 = dma.done %s716, 64
        $region92: #{tpu_custom_call.1} parent=79 // pred_fallthru
          _
      $region80: #{tpu_custom_call.1} parent=5 // pred_fallthru
        _
    $region6: #{tpu_custom_call.1} parent=1 // loop_footer
      %s31 = sadd.s32 1, %s27
    $region7: #{tpu_custom_call.1} parent=1 // loop_footer_branch
      %26 = sbr.rel target = $region3
    $region8: #{tpu_custom_call.1} parent=1 // loop_exit
      _
    %721 = vsyncpa [#allocation3], 1
    %s722 = scalar_lea.sflag [#allocation3], 1
    %723 = vsyncpa %s722, 1
    %724 = vsyncpa [#allocation6], 1
    %725 = vsyncpa [#allocation9], 1
    %726 = vsyncpa [#allocation4], 1
    %s727 = scalar_lea.sflag [#allocation4], 1
    %728 = vsyncpa %s727, 1
    %729 = vsyncpa [#allocation12], 1
    %s730 = scalar_lea.sflag [#allocation12], 1
    %731 = vsyncpa %s730, 1

// kernel: tpu_custom_call.1
$region0: #{tpu_custom_call.1}
  #allocation0 [shape = 'u32[]', space=smem, size = 0x4, offset = 0x4, fixed_abs, tag = 'smem constant byte address 0x4 - core index']
  #allocation1 [shape = 'u32[144,128]{1,0:T(1,128)}', space=vmem, size = 0x12000, scoped, tag = 'internal scratch']
  %s0 = inlined_call_operand.hbm [shape: bf16[2,8,32], index: 0, kind: input, shape index: {}]
  %s1 = inlined_call_operand.hbm [shape: bf16[32,128], index: 1, kind: input, shape index: {}]
  %s2 = inlined_call_operand.hbm [shape: bf16[32,128], index: 2, kind: input, shape index: {}]
  %s3 = inlined_call_operand.hbm [shape: bf16[32,128], index: 3, kind: input, shape index: {}]
  %s4 = inlined_call_operand.vmem [shape: f32[1,128], index: 4, kind: input, shape index: {}]
  %s5 = inlined_call_operand.vmem [shape: f32[1,128], index: 5, kind: input, shape index: {}]
  %s6 = inlined_call_operand.vmem [shape: f32[1,128], index: 6, kind: input, shape index: {}]
  %s7 = inlined_call_operand.hbm [shape: bf16[2,8,128], index: 7, kind: output, shape index: {0}]
  %s8 = inlined_call_operand.hbm [shape: bf16[2,8,128], index: 8, kind: output, shape index: {1}]
  %s9 = inlined_call_operand.hbm [shape: bf16[2,8,128], index: 9, kind: output, shape index: {2}]
  %10 = xla_tuple %s7, %s8, %s9
  %s11 = sld [smem:[#allocation0]]
  $region93: #{tpu_custom_call.1} parent=0
    _
  %s13 = ssub.s32 1, %s11
  %s14 = scalar_select 0, %s13, %s11
  $region1: #{tpu_custom_call.1} parent=0
    #allocation2 [shape = 'u8[4096]{0}', space=vmem, size = 0x1000, scoped, tag = 'input window, operand 0']
    #allocation3 [shape = 's32[2]{0}', space=sflag, size = 0x8, scoped, tag = 'scoped memory for tpu_custom_call.1']
    #allocation4 [shape = 's32[2]{0}', space=sflag, size = 0x8, scoped, tag = 'scoped memory for tpu_custom_call.1']
    #allocation5 [shape = 'u8[8192]{0}', space=vmem, size = 0x2000, scoped, tag = 'input window, operand 1, single buffered']
    #allocation6 [shape = 's32[1]{0}', space=sflag, size = 0x4, scoped, tag = 'scoped memory for tpu_custom_call.1']
    #allocation7 [shape = 'u8[8192]{0}', space=vmem, size = 0x2000, scoped, tag = 'input window, operand 2, single buffered']
    #allocation8 [shape = 'u8[8192]{0}', space=vmem, size = 0x2000, scoped, tag = 'input window, operand 3, single buffered']
    #allocation9 [shape = 's32[1]{0}', space=sflag, size = 0x4, scoped, tag = 'scoped memory for tpu_custom_call.1']
    #allocation10 [shape = 'u8[4096]{0}', space=vmem, size = 0x1000, scoped, tag = 'output window, operand 0']
    #allocation11 [shape = 'u8[4096]{0}', space=vmem, size = 0x1000, scoped, tag = 'output window, operand 1']
    #allocation12 [shape = 's32[2]{0}', space=sflag, size = 0x8, scoped, tag = 'scoped memory for tpu_custom_call.1']
    #allocation13 [shape = 'u8[4096]{0}', space=vmem, size = 0x1000, scoped, tag = 'output window, operand 2']
    %15 = vsyncpa [#allocation3], 0
    %s16 = scalar_lea.sflag [#allocation3], 1
    %17 = vsyncpa %s16, 0
    %18 = vsyncpa [#allocation6], 0
    %19 = vsyncpa [#allocation9], 0
    %20 = vsyncpa [#allocation4], 0
    %s21 = scalar_lea.sflag [#allocation4], 1
    %22 = vsyncpa %s21, 0
    %23 = vsyncpa [#allocation12], 0
    %s24 = scalar_lea.sflag [#allocation12], 1
    %25 = vsyncpa %s24, 0
    loop: start=0, step=1, limit=4
    $region2: #{tpu_custom_call.1} parent=1 // loop_pre_header
      _
    $region3: #{tpu_custom_call.1} parent=1 // loop_header
      %s27 = sphi 0, %s31
      %p28 = scmp.ge.s32.totalorder %s27, 4
      %s34 = sphi 0, %s46
      %s35 = sphi 0, %s42
      %s36 = sphi 0, %s34
      %s37 = sphi 0, %s35
      %s38 = sphi 0, %s36
      %s39 = sphi 0, %s37
      %s51 = sphi 0, %s53
      %s54 = sphi 0, %s51
      %s55 = sphi 0, %s54
      %s71 = sphi 0, %s55
      %s75 = sphi 0, %s75
      %s77 = sphi 0, %s75
      %s78 = sphi 0, %s77
      %s92 = sphi 0, %s78
      %s96 = sphi 0, %s96
      %s98 = sphi 0, %s96
      %s99 = sphi 0, %s98
      %s113 = sphi 0, %s99
      %s117 = sphi 0, %s117
      %s119 = sphi 0, %s117
      %s120 = sphi 0, %s119
      %s134 = sphi 0, %s120
      %s138 = sphi 0, %s138
      %s140 = sphi 0, %s138
      %s141 = sphi 0, %s140
      %s155 = sphi 0, %s141
      %s159 = sphi 0, %s159
      %s161 = sphi 0, %s159
      %s162 = sphi 0, %s161
      %s176 = sphi 0, %s162
      %s180 = sphi 0, %s180
      %s182 = sphi 0, %s180
      %s183 = sphi 0, %s182
      %s197 = sphi 0, %s183
      %s205 = sphi 0, %s207
      %s208 = sphi 0, %s205
      %s209 = sphi 0, %s208
      %s225 = sphi 0, %s209
      %s233 = sphi 0, %s235
      %s236 = sphi 0, %s233
      %s237 = sphi 0, %s236
      %s253 = sphi 0, %s237
      %s261 = sphi 0, %s263
      %s264 = sphi 0, %s261
      %s265 = sphi 0, %s264
      %s281 = sphi 0, %s265
    $region4: #{tpu_custom_call.1} parent=1 // loop_header_branch
      %30 = sbr.rel (%p28) target = $region8
    $region5: #{tpu_custom_call.1} parent=1 // loop_body
      %s32 = ssub.s32 %s27, 1
      %s33 = ssub.s32 %s27, 2
      %s40 = sadd.s32 1, %s35
      %p41 = scmp.ge.s32.totalorder %s40, 1
      %s42 = scalar_select %p41, 0, %s40
      %s43 = sadd.s32 1, %s34
      %s44 = scalar_select %p41, %s43, %s34
      %p45 = scmp.ge.s32.totalorder %s44, 2
      %s46 = scalar_select %p45, 0, %s44
      %s47 = ssub.s32 %s34, %s46
      %s48 = ssub.s32 %s35, %s42
      %s49 = sor.u32 %s47, %s48
      %p50 = scmp.eq.s32.totalorder %s49, 0
      %s52 = sadd.s32 %s51, 1
      %s53 = scalar_select %p50, %s51, %s52
      %p56 = pneg %p50
      %p57 = scmp.eq.s32.totalorder %s27, 1
      %p58 = por %p56, %p57
      %p59 = scmp.ne.s32.totalorder %s51, %s54
      %p60 = scmp.eq.s32.totalorder %s27, 0
      %p61 = por %p59, %p60
      %p62 = scmp.ne.s32.totalorder %s51, %s54
      %p63 = scmp.eq.s32.totalorder %s32, 1
      %p64 = por %p62, %p63
      %p65 = scmp.ne.s32.totalorder %s54, %s55
      %p66 = scmp.eq.s32.totalorder %s32, 0
      %p67 = por %p65, %p66
      %p68 = scmp.ne.s32.totalorder %s54, %s55
      %p69 = scmp.eq.s32.totalorder %s33, 1
      %p70 = por %p68, %p69
      %p72 = scmp.ne.s32.totalorder %s55, %s71
      %p73 = scmp.eq.s32.totalorder %s33, 0
      %p74 = por %p72, %p73
      %s76 = sadd.s32 %s75, 1
      %p79 = scmp.eq.s32.totalorder %s27, 1
      %p80 = scmp.ne.s32.totalorder %s75, %s77
      %p81 = scmp.eq.s32.totalorder %s27, 0
      %p82 = por %p80, %p81
      %p83 = scmp.ne.s32.totalorder %s75, %s77
      %p84 = scmp.eq.s32.totalorder %s32, 1
      %p85 = por %p83, %p84
      %p86 = scmp.ne.s32.totalorder %s77, %s78
      %p87 = scmp.eq.s32.totalorder %s32, 0
      %p88 = por %p86, %p87
      %p89 = scmp.ne.s32.totalorder %s77, %s78
      %p90 = scmp.eq.s32.totalorder %s33, 1
      %p91 = por %p89, %p90
      %p93 = scmp.ne.s32.totalorder %s78, %s92
      %p94 = scmp.eq.s32.totalorder %s33, 0
      %p95 = por %p93, %p94
      %s97 = sadd.s32 %s96, 1
      %p100 = scmp.eq.s32.totalorder %s27, 1
      %p101 = scmp.ne.s32.totalorder %s96, %s98
      %p102 = scmp.eq.s32.totalorder %s27, 0
      %p103 = por %p101, %p102
      %p104 = scmp.ne.s32.totalorder %s96, %s98
      %p105 = scmp.eq.s32.totalorder %s32, 1
      %p106 = por %p104, %p105
      %p107 = scmp.ne.s32.totalorder %s98, %s99
      %p108 = scmp.eq.s32.totalorder %s32, 0
      %p109 = por %p107, %p108
      %p110 = scmp.ne.s32.totalorder %s98, %s99
      %p111 = scmp.eq.s32.totalorder %s33, 1
      %p112 = por %p110, %p111
      %p114 = scmp.ne.s32.totalorder %s99, %s113
      %p115 = scmp.eq.s32.totalorder %s33, 0
      %p116 = por %p114, %p115
      %s118 = sadd.s32 %s117, 1
      %p121 = scmp.eq.s32.totalorder %s27, 1
      %p122 = scmp.ne.s32.totalorder %s117, %s119
      %p123 = scmp.eq.s32.totalorder %s27, 0
      %p124 = por %p122, %p123
      %p125 = scmp.ne.s32.totalorder %s117, %s119
      %p126 = scmp.eq.s32.totalorder %s32, 1
      %p127 = por %p125, %p126
      %p128 = scmp.ne.s32.totalorder %s119, %s120
      %p129 = scmp.eq.s32.totalorder %s32, 0
      %p130 = por %p128, %p129
      %p131 = scmp.ne.s32.totalorder %s119, %s120
      %p132 = scmp.eq.s32.totalorder %s33, 1
      %p133 = por %p131, %p132
      %p135 = scmp.ne.s32.totalorder %s120, %s134
      %p136 = scmp.eq.s32.totalorder %s33, 0
      %p137 = por %p135, %p136
      %s139 = sadd.s32 %s138, 1
      %p142 = scmp.eq.s32.totalorder %s27, 1
      %p143 = scmp.ne.s32.totalorder %s138, %s140
      %p144 = scmp.eq.s32.totalorder %s27, 0
      %p145 = por %p143, %p144
      %p146 = scmp.ne.s32.totalorder %s138, %s140
      %p147 = scmp.eq.s32.totalorder %s32, 1
      %p148 = por %p146, %p147
      %p149 = scmp.ne.s32.totalorder %s140, %s141
      %p150 = scmp.eq.s32.totalorder %s32, 0
      %p151 = por %p149, %p150
      %p152 = scmp.ne.s32.totalorder %s140, %s141
      %p153 = scmp.eq.s32.totalorder %s33, 1
      %p154 = por %p152, %p153
      %p156 = scmp.ne.s32.totalorder %s141, %s155
      %p157 = scmp.eq.s32.totalorder %s33, 0
      %p158 = por %p156, %p157
      %s160 = sadd.s32 %s159, 1
      %p163 = scmp.eq.s32.totalorder %s27, 1
      %p164 = scmp.ne.s32.totalorder %s159, %s161
      %p165 = scmp.eq.s32.totalorder %s27, 0
      %p166 = por %p164, %p165
      %p167 = scmp.ne.s32.totalorder %s159, %s161
      %p168 = scmp.eq.s32.totalorder %s32, 1
      %p169 = por %p167, %p168
      %p170 = scmp.ne.s32.totalorder %s161, %s162
      %p171 = scmp.eq.s32.totalorder %s32, 0
      %p172 = por %p170, %p171
      %p173 = scmp.ne.s32.totalorder %s161, %s162
      %p174 = scmp.eq.s32.totalorder %s33, 1
      %p175 = por %p173, %p174
      %p177 = scmp.ne.s32.totalorder %s162, %s176
      %p178 = scmp.eq.s32.totalorder %s33, 0
      %p179 = por %p177, %p178
      %s181 = sadd.s32 %s180, 1
      %p184 = scmp.eq.s32.totalorder %s27, 1
      %p185 = scmp.ne.s32.totalorder %s180, %s182
      %p186 = scmp.eq.s32.totalorder %s27, 0
      %p187 = por %p185, %p186
      %p188 = scmp.ne.s32.totalorder %s180, %s182
      %p189 = scmp.eq.s32.totalorder %s32, 1
      %p190 = por %p188, %p189
      %p191 = scmp.ne.s32.totalorder %s182, %s183
      %p192 = scmp.eq.s32.totalorder %s32, 0
      %p193 = por %p191, %p192
      %p194 = scmp.ne.s32.totalorder %s182, %s183
      %p195 = scmp.eq.s32.totalorder %s33, 1
      %p196 = por %p194, %p195
      %p198 = scmp.ne.s32.totalorder %s183, %s197
      %p199 = scmp.eq.s32.totalorder %s33, 0
      %p200 = por %p198, %p199
      %s201 = ssub.s32 %s34, %s46
      %s202 = ssub.s32 %s35, %s42
      %s203 = sor.u32 %s201, %s202
      %p204 = scmp.eq.s32.totalorder %s203, 0
      %s206 = sadd.s32 %s205, 1
      %s207 = scalar_select %p204, %s205, %s206
      %p210 = pneg %p204
      %p211 = scmp.eq.s32.totalorder %s27, 1
      %p212 = por %p210, %p211
      %p213 = scmp.ne.s32.totalorder %s205, %s208
      %p214 = scmp.eq.s32.totalorder %s27, 0
      %p215 = por %p213, %p214
      %p216 = scmp.ne.s32.totalorder %s205, %s208
      %p217 = scmp.eq.s32.totalorder %s32, 1
      %p218 = por %p216, %p217
      %p219 = scmp.ne.s32.totalorder %s208, %s209
      %p220 = scmp.eq.s32.totalorder %s32, 0
      %p221 = por %p219, %p220
      %p222 = scmp.ne.s32.totalorder %s208, %s209
      %p223 = scmp.eq.s32.totalorder %s33, 1
      %p224 = por %p222, %p223
      %p226 = scmp.ne.s32.totalorder %s209, %s225
      %p227 = scmp.eq.s32.totalorder %s33, 0
      %p228 = por %p226, %p227
      %s229 = ssub.s32 %s34, %s46
      %s230 = ssub.s32 %s35, %s42
      %s231 = sor.u32 %s229, %s230
      %p232 = scmp.eq.s32.totalorder %s231, 0
      %s234 = sadd.s32 %s233, 1
      %s235 = scalar_select %p232, %s233, %s234
      %p238 = pneg %p232
      %p239 = scmp.eq.s32.totalorder %s27, 1
      %p240 = por %p238, %p239
      %p241 = scmp.ne.s32.totalorder %s233, %s236
      %p242 = scmp.eq.s32.totalorder %s27, 0
      %p243 = por %p241, %p242
      %p244 = scmp.ne.s32.totalorder %s233, %s236
      %p245 = scmp.eq.s32.totalorder %s32, 1
      %p246 = por %p244, %p245
      %p247 = scmp.ne.s32.totalorder %s236, %s237
      %p248 = scmp.eq.s32.totalorder %s32, 0
      %p249 = por %p247, %p248
      %p250 = scmp.ne.s32.totalorder %s236, %s237
      %p251 = scmp.eq.s32.totalorder %s33, 1
      %p252 = por %p250, %p251
      %p254 = scmp.ne.s32.totalorder %s237, %s253
      %p255 = scmp.eq.s32.totalorder %s33, 0
      %p256 = por %p254, %p255
      %s257 = ssub.s32 %s34, %s46
      %s258 = ssub.s32 %s35, %s42
      %s259 = sor.u32 %s257, %s258
      %p260 = scmp.eq.s32.totalorder %s259, 0
      %s262 = sadd.s32 %s261, 1
      %s263 = scalar_select %p260, %s261, %s262
      %p266 = pneg %p260
      %p267 = scmp.eq.s32.totalorder %s27, 1
      %p268 = por %p266, %p267
      %p269 = scmp.ne.s32.totalorder %s261, %s264
      %p270 = scmp.eq.s32.totalorder %s27, 0
      %p271 = por %p269, %p270
      %p272 = scmp.ne.s32.totalorder %s261, %s264
      %p273 = scmp.eq.s32.totalorder %s32, 1
      %p274 = por %p272, %p273
      %p275 = scmp.ne.s32.totalorder %s264, %s265
      %p276 = scmp.eq.s32.totalorder %s32, 0
      %p277 = por %p275, %p276
      %p278 = scmp.ne.s32.totalorder %s264, %s265
      %p279 = scmp.eq.s32.totalorder %s33, 1
      %p280 = por %p278, %p279
      %p282 = scmp.ne.s32.totalorder %s265, %s281
      %p283 = scmp.eq.s32.totalorder %s33, 0
      %p284 = por %p282, %p283
      %p285 = scmp.le.s32.totalorder 1, %s27
      %p286 = scmp.lt.s32.totalorder %s27, 3
      %p287 = pnand %p285, %p286
      %p288 = pneg %p287
      // Predicated region
      $region9: #{tpu_custom_call.1} parent=5 // pred_check
        _
      $region10: #{tpu_custom_call.1} parent=5 // pred_check_branch
        %290 = sbr.rel (%p287) target = $region12
      $region11: #{tpu_custom_call.1} parent=5 // pred_region
        %s291 = ssub.s32 %s27, 1
        // Predicated region
        $region13: #{tpu_custom_call.1} parent=11 // pred_check
          %p292 = pneg %p88
        $region14: #{tpu_custom_call.1} parent=11 // pred_check_branch
          %294 = sbr.rel (%p292) target = $region16
        $region15: #{tpu_custom_call.1} parent=11 // pred_region
          %s296 = ssub.s32 256, 256
          %297 = vsyncadd [#allocation6], %s296
          %s298 = sshll.u32 [#allocation5], 4
          %s299 = int_to_ptr.vmem [resolvable:$true] %s298
          %304 = dma.hbm_to_vmem [thread:$0]  %s1, 256, %s299, [#allocation6], 64, 64, 4
        $region16: #{tpu_custom_call.1} parent=11 // pred_fallthru
          _
        // Predicated region
        $region17: #{tpu_custom_call.1} parent=11 // pred_check
          %p305 = pneg %p109
        $region18: #{tpu_custom_call.1} parent=11 // pred_check_branch
          %307 = sbr.rel (%p305) target = $region20
        $region19: #{tpu_custom_call.1} parent=11 // pred_region
          %s309 = ssub.s32 256, 256
          %310 = vsyncadd [#allocation6], %s309
          %s311 = sshll.u32 [#allocation7], 4
          %s312 = int_to_ptr.vmem [resolvable:$true] %s311
          %317 = dma.hbm_to_vmem [thread:$0]  %s2, 256, %s312, [#allocation6], 64, 64, 4
        $region20: #{tpu_custom_call.1} parent=11 // pred_fallthru
          _
        // Predicated region
        $region21: #{tpu_custom_call.1} parent=11 // pred_check
          %p318 = pneg %p130
        $region22: #{tpu_custom_call.1} parent=11 // pred_check_branch
          %320 = sbr.rel (%p318) target = $region24
        $region23: #{tpu_custom_call.1} parent=11 // pred_region
          %s322 = ssub.s32 256, 256
          %323 = vsyncadd [#allocation9], %s322
          %s324 = sshll.u32 [#allocation8], 4
          %s325 = int_to_ptr.vmem [resolvable:$true] %s324
          %330 = dma.hbm_to_vmem [thread:$0]  %s3, 256, %s325, [#allocation9], 64, 64, 4
        $region24: #{tpu_custom_call.1} parent=11 // pred_fallthru
          _
        // Predicated region
        $region25: #{tpu_custom_call.1} parent=11 // pred_check
          %p331 = pneg %p151
        $region26: #{tpu_custom_call.1} parent=11 // pred_check_branch
          %333 = sbr.rel (%p331) target = $region28
        $region27: #{tpu_custom_call.1} parent=11 // pred_region
          _
        $region28: #{tpu_custom_call.1} parent=11 // pred_fallthru
          _
        // Predicated region
        $region29: #{tpu_custom_call.1} parent=11 // pred_check
          %p334 = pneg %p172
        $region30: #{tpu_custom_call.1} parent=11 // pred_check_branch
          %336 = sbr.rel (%p334) target = $region32
        $region31: #{tpu_custom_call.1} parent=11 // pred_region
          _
        $region32: #{tpu_custom_call.1} parent=11 // pred_fallthru
          _
        // Predicated region
        $region33: #{tpu_custom_call.1} parent=11 // pred_check
          %p337 = pneg %p193
        $region34: #{tpu_custom_call.1} parent=11 // pred_check_branch
          %339 = sbr.rel (%p337) target = $region36
        $region35: #{tpu_custom_call.1} parent=11 // pred_region
          _
        $region36: #{tpu_custom_call.1} parent=11 // pred_fallthru
          _
      $region12: #{tpu_custom_call.1} parent=5 // pred_fallthru
        _
      %p340 = scmp.lt.s32.totalorder %s27, 2
      // Predicated region
      $region37: #{tpu_custom_call.1} parent=5 // pred_check
        %p341 = pneg %p340
      $region38: #{tpu_custom_call.1} parent=5 // pred_check_branch
        %343 = sbr.rel (%p341) target = $region40
      $region39: #{tpu_custom_call.1} parent=5 // pred_region
        // Predicated region
        $region41: #{tpu_custom_call.1} parent=39 // pred_check
          %p344 = pneg %p61
        $region42: #{tpu_custom_call.1} parent=39 // pred_check_branch
          %346 = sbr.rel (%p344) target = $region44
        $region43: #{tpu_custom_call.1} parent=39 // pred_region
          %s347 = sand.u32 %s51, 1
          %s348 = scalar_lea.sflag [#allocation3], %s347
          %s349 = sand.u32 %s51, 1
          %s350 = smul.addr %s349, 4
          %s351 = scalar_lea.vmem [#allocation2], %s350
          %s353 = ssub.s32 64, 64
          %354 = vsyncadd %s348, %s353
          %s355 = sadd.s32 %s35, %s34
          %s356 = smul.addr %s355, 64
          %s357 = scalar_lea.hbm %s0, %s356
          %s359 = sshll.u32 %s351, 4
          %s360 = int_to_ptr.vmem [resolvable:$true] %s359
          %362 = dma.hbm_to_vmem [thread:$0]  %s357, 64, %s360, %s348
        $region44: #{tpu_custom_call.1} parent=39 // pred_fallthru
          _
      $region40: #{tpu_custom_call.1} parent=5 // pred_fallthru
        _
      %p363 = scmp.le.s32.totalorder 1, %s27
      %p364 = scmp.lt.s32.totalorder %s27, 3
      %p365 = pnand %p363, %p364
      %p366 = pneg %p365
      // Predicated region
      $region45: #{tpu_custom_call.1} parent=5 // pred_check
        _
      $region46: #{tpu_custom_call.1} parent=5 // pred_check_branch
        %368 = sbr.rel (%p365) target = $region48
      $region47: #{tpu_custom_call.1} parent=5 // pred_region
        %s369 = ssub.s32 %s27, 1
        %s370 = sand.u32 %s54, 1
        %s371 = scalar_lea.sflag [#allocation3], %s370
        %s372 = sand.u32 %s54, 1
        %s373 = smul.addr %s372, 4
        %s374 = scalar_lea.vmem [#allocation2], %s373
        // Predicated region
        $region49: #{tpu_custom_call.1} parent=47 // pred_check
          %p375 = pneg %p67
        $region50: #{tpu_custom_call.1} parent=47 // pred_check_branch
          %377 = sbr.rel (%p375) target = $region52
        $region51: #{tpu_custom_call.1} parent=47 // pred_region
          %378 = dma.done %s371, 64
        $region52: #{tpu_custom_call.1} parent=47 // pred_fallthru
          _
        // Predicated region
        $region53: #{tpu_custom_call.1} parent=47 // pred_check
          %p379 = pneg %p88
        $region54: #{tpu_custom_call.1} parent=47 // pred_check_branch
          %381 = sbr.rel (%p379) target = $region56
        $region55: #{tpu_custom_call.1} parent=47 // pred_region
          %382 = dma.done [#allocation6], 256
        $region56: #{tpu_custom_call.1} parent=47 // pred_fallthru
          _
        // Predicated region
        $region57: #{tpu_custom_call.1} parent=47 // pred_check
          %p383 = pneg %p109
        $region58: #{tpu_custom_call.1} parent=47 // pred_check_branch
          %385 = sbr.rel (%p383) target = $region60
        $region59: #{tpu_custom_call.1} parent=47 // pred_region
          %386 = dma.done [#allocation6], 256
        $region60: #{tpu_custom_call.1} parent=47 // pred_fallthru
          _
        // Predicated region
        $region61: #{tpu_custom_call.1} parent=47 // pred_check
          %p387 = pneg %p130
        $region62: #{tpu_custom_call.1} parent=47 // pred_check_branch
          %389 = sbr.rel (%p387) target = $region64
        $region63: #{tpu_custom_call.1} parent=47 // pred_region
          %390 = dma.done [#allocation9], 256
        $region64: #{tpu_custom_call.1} parent=47 // pred_fallthru
          _
        %s391 = sand.u32 %s54, 1
        %s392 = scalar_lea.sflag [#allocation3], %s391
        %s393 = sand.u32 %s54, 1
        %s394 = smul.addr %s393, 4
        %s395 = scalar_lea.vmem [#allocation2], %s394
        %p396 = pneg %p67
        %p397 = pneg %p64
        %p398 = pneg %p88
        %p399 = pneg %p85
        %p400 = pneg %p109
        %p401 = pneg %p106
        %p402 = pneg %p130
        %p403 = pneg %p127
        %p404 = pneg %p151
        %p405 = pneg %p148
        %p406 = pneg %p172
        %p407 = pneg %p169
        %p408 = pneg %p193
        %p409 = pneg %p190
        %p410 = pneg %p221
        %p411 = pneg %p218
        %s412 = sand.u32 %s208, 1
        %s413 = scalar_lea.sflag [#allocation4], %s412
        %s414 = sand.u32 %s208, 1
        %s415 = smul.addr %s414, 4
        %s416 = scalar_lea.vmem [#allocation10], %s415
        %p417 = pneg %p249
        %p418 = pneg %p246
        %s419 = sand.u32 %s32, 1
        %s420 = scalar_lea.sflag [#allocation12], %s419
        %s421 = sand.u32 %s236, 1
        %s422 = smul.addr %s421, 4
        %s423 = scalar_lea.vmem [#allocation11], %s422
        %p424 = pneg %p277
        %p425 = pneg %p274
        %s426 = sand.u32 %s32, 1
        %s427 = scalar_lea.sflag [#allocation12], %s426
        %s428 = sand.u32 %s264, 1
        %s429 = smul.addr %s428, 4
        %s430 = scalar_lea.vmem [#allocation13], %s429
        %v432 = vld [vmem:[%s374] sm:$0xf]
        %v433 = vld [vmem:[#allocation5] sm:$0xf]
        %v434 = vld [vmem:[#allocation5 + $0x4] sm:$0xf]
        %v435 = vld [vmem:[#allocation5 + $0x8] sm:$0xf]
        %v436 = vld [vmem:[#allocation5 + $0xc] sm:$0xf]
        %v437 = vld [vmem:[%s4] sm:$0x1]
        %v439 = vlaneseq
        %v440 = vshrl.u32 %v439, 7
        %v441 = vsub.s32 0, %v440
        %v442 = vrot.slane %v437, %v441
        %v448 = vunpack.c.l.b16 %v433
        %v449 = vunpack.c.l.b16 %v434
        %v450 = vunpack.c.l.b16 %v435
        %v451 = vunpack.c.l.b16 %v436
        %v452 = vpack.c.b16 %v449, %v448
        %v453 = vpack.c.b16 %v451, %v450
        %vm456 = vcmask 261120
        %v458 = vsel %vm456, %v432, 0
        %460 = vmatprep.subr.bf16.mxu0 0
        %461 = vmatpush1.bf16.msra.mxu0 %v452
        %462 = vmatprep.subr.bf16.mxu0 0
        %463 = vmatpush1.bf16.msra.mxu0 %v453
        %464 = vmatprep.subr.bf16.mxu0 0
        %465 = vmatpush1.bf16.msra.mxu0 0
        %466 = vmatprep.subr.bf16.mxu0 0
        %467 = vmatpush1.bf16.msra.mxu0 0
        %468 = vmatprep.subr.bf16.mxu0 0
        %469 = vmatpush1.bf16.msra.mxu0 0
        %470 = vmatprep.subr.bf16.mxu0 0
        %471 = vmatpush1.bf16.msra.mxu0 0
        %472 = vmatprep.subr.bf16.mxu0 0
        %473 = vmatpush1.bf16.msra.mxu0 0
        %474 = vmatprep.subr.bf16.mxu0 0
        %475 = vmatpush1.bf16.msra.mxu0 0
        %476 = vmatprep.subr.bf16.mxu0 0
        %477 = vmatpush1.bf16.msra.mxu0 0
        %478 = vmatprep.subr.bf16.mxu0 0
        %479 = vmatpush1.bf16.msra.mxu0 0
        %480 = vmatprep.subr.bf16.mxu0 0
        %481 = vmatpush1.bf16.msra.mxu0 0
        %482 = vmatprep.subr.bf16.mxu0 0
        %483 = vmatpush1.bf16.msra.mxu0 0
        %484 = vmatprep.subr.bf16.mxu0 0
        %485 = vmatpush1.bf16.msra.mxu0 0
        %486 = vmatprep.subr.bf16.mxu0 0
        %487 = vmatpush1.bf16.msra.mxu0 0
        %488 = vmatprep.subr.bf16.mxu0 0
        %489 = vmatpush1.bf16.msra.mxu0 0
        %490 = vmatprep.subr.bf16.mxu0 0
        %491 = vmatpush1.bf16.msra.mxu0 0
        %492 = vmatprep.mubr.bf16.mxu0 0
        %493 = vmatmul.mubr.bf16.gmra.mrb[0].mxu0 %v458
        %v494 = vpop.f32.mrb[0].mxu0
        %v495 = vadd.f32 %v442, %v494
        %v496 = vpop.f32.mrb[0].mxu0
        %v497 = vpop.f32.mrb[0].mxu0
        %v498 = vpop.f32.mrb[0].mxu0
        %499 = vdwg.mxu0
        %v500 = vpack.c.bf16 %v495, %v495
        %501 = vst [vmem:[%s416] sm:$0xf] %v500
        %v502 = vld [vmem:[#allocation7] sm:$0xf]
        %v503 = vld [vmem:[#allocation7 + $0x4] sm:$0xf]
        %v504 = vld [vmem:[#allocation7 + $0x8] sm:$0xf]
        %v505 = vld [vmem:[#allocation7 + $0xc] sm:$0xf]
        %v506 = vld [vmem:[%s5] sm:$0x1]
        %v508 = vlaneseq
        %v509 = vshrl.u32 %v508, 7
        %v510 = vsub.s32 0, %v509
        %v511 = vrot.slane %v506, %v510
        %v517 = vunpack.c.l.b16 %v502
        %v518 = vunpack.c.l.b16 %v503
        %v519 = vunpack.c.l.b16 %v504
        %v520 = vunpack.c.l.b16 %v505
        %v521 = vpack.c.b16 %v518, %v517
        %v522 = vpack.c.b16 %v520, %v519
        %525 = vmatprep.subr.bf16.mxu0 0
        %526 = vmatpush1.bf16.msra.mxu0 %v521
        %527 = vmatprep.subr.bf16.mxu0 0
        %528 = vmatpush1.bf16.msra.mxu0 %v522
        %529 = vmatprep.subr.bf16.mxu0 0
        %530 = vmatpush1.bf16.msra.mxu0 0
        %531 = vmatprep.subr.bf16.mxu0 0
        %532 = vmatpush1.bf16.msra.mxu0 0
        %533 = vmatprep.subr.bf16.mxu0 0
        %534 = vmatpush1.bf16.msra.mxu0 0
        %535 = vmatprep.subr.bf16.mxu0 0
        %536 = vmatpush1.bf16.msra.mxu0 0
        %537 = vmatprep.subr.bf16.mxu0 0
        %538 = vmatpush1.bf16.msra.mxu0 0
        %539 = vmatprep.subr.bf16.mxu0 0
        %540 = vmatpush1.bf16.msra.mxu0 0
        %541 = vmatprep.subr.bf16.mxu0 0
        %542 = vmatpush1.bf16.msra.mxu0 0
        %543 = vmatprep.subr.bf16.mxu0 0
        %544 = vmatpush1.bf16.msra.mxu0 0
        %545 = vmatprep.subr.bf16.mxu0 0
        %546 = vmatpush1.bf16.msra.mxu0 0
        %547 = vmatprep.subr.bf16.mxu0 0
        %548 = vmatpush1.bf16.msra.mxu0 0
        %549 = vmatprep.subr.bf16.mxu0 0
        %550 = vmatpush1.bf16.msra.mxu0 0
        %551 = vmatprep.subr.bf16.mxu0 0
        %552 = vmatpush1.bf16.msra.mxu0 0
        %553 = vmatprep.subr.bf16.mxu0 0
        %554 = vmatpush1.bf16.msra.mxu0 0
        %555 = vmatprep.subr.bf16.mxu0 0
        %556 = vmatpush1.bf16.msra.mxu0 0
        %557 = vmatprep.mubr.bf16.mxu0 0
        %558 = vmatmul.mubr.bf16.gmra.mrb[0].mxu0 %v458
        %v559 = vpop.f32.mrb[0].mxu0
        %v560 = vadd.f32 %v511, %v559
        %v561 = vpop.f32.mrb[0].mxu0
        %v562 = vpop.f32.mrb[0].mxu0
        %v563 = vpop.f32.mrb[0].mxu0
        %564 = vdwg.mxu0
        %v565 = vpack.c.bf16 %v560, %v560
        %566 = vst [vmem:[%s423] sm:$0xf] %v565
        %v567 = vld [vmem:[#allocation8] sm:$0xf]
        %v568 = vld [vmem:[#allocation8 + $0x4] sm:$0xf]
        %v569 = vld [vmem:[#allocation8 + $0x8] sm:$0xf]
        %v570 = vld [vmem:[#allocation8 + $0xc] sm:$0xf]
        %v571 = vld [vmem:[%s6] sm:$0x1]
        %v573 = vlaneseq
        %v574 = vshrl.u32 %v573, 7
        %v575 = vsub.s32 0, %v574
        %v576 = vrot.slane %v571, %v575
        %v582 = vunpack.c.l.b16 %v567
        %v583 = vunpack.c.l.b16 %v568
        %v584 = vunpack.c.l.b16 %v569
        %v585 = vunpack.c.l.b16 %v570
        %v586 = vpack.c.b16 %v583, %v582
        %v587 = vpack.c.b16 %v585, %v584
        %590 = vmatprep.subr.bf16.mxu0 0
        %591 = vmatpush1.bf16.msra.mxu0 %v586
        %592 = vmatprep.subr.bf16.mxu0 0
        %593 = vmatpush1.bf16.msra.mxu0 %v587
        %594 = vmatprep.subr.bf16.mxu0 0
        %595 = vmatpush1.bf16.msra.mxu0 0
        %596 = vmatprep.subr.bf16.mxu0 0
        %597 = vmatpush1.bf16.msra.mxu0 0
        %598 = vmatprep.subr.bf16.mxu0 0
        %599 = vmatpush1.bf16.msra.mxu0 0
        %600 = vmatprep.subr.bf16.mxu0 0
        %601 = vmatpush1.bf16.msra.mxu0 0
        %602 = vmatprep.subr.bf16.mxu0 0
        %603 = vmatpush1.bf16.msra.mxu0 0
        %604 = vmatprep.subr.bf16.mxu0 0
        %605 = vmatpush1.bf16.msra.mxu0 0
        %606 = vmatprep.subr.bf16.mxu0 0
        %607 = vmatpush1.bf16.msra.mxu0 0
        %608 = vmatprep.subr.bf16.mxu0 0
        %609 = vmatpush1.bf16.msra.mxu0 0
        %610 = vmatprep.subr.bf16.mxu0 0
        %611 = vmatpush1.bf16.msra.mxu0 0
        %612 = vmatprep.subr.bf16.mxu0 0
        %613 = vmatpush1.bf16.msra.mxu0 0
        %614 = vmatprep.subr.bf16.mxu0 0
        %615 = vmatpush1.bf16.msra.mxu0 0
        %616 = vmatprep.subr.bf16.mxu0 0
        %617 = vmatpush1.bf16.msra.mxu0 0
        %618 = vmatprep.subr.bf16.mxu0 0
        %619 = vmatpush1.bf16.msra.mxu0 0
        %620 = vmatprep.subr.bf16.mxu0 0
        %621 = vmatpush1.bf16.msra.mxu0 0
        %622 = vmatprep.mubr.bf16.mxu0 0
        %623 = vmatmul.mubr.bf16.gmra.mrb[0].mxu0 %v458
        %v624 = vpop.f32.mrb[0].mxu0
        %v625 = vadd.f32 %v576, %v624
        %v626 = vpop.f32.mrb[0].mxu0
        %v627 = vpop.f32.mrb[0].mxu0
        %v628 = vpop.f32.mrb[0].mxu0
        %629 = vdwg.mxu0
        %v630 = vpack.c.bf16 %v625, %v625
        %631 = vst [vmem:[%s430] sm:$0xf] %v630
        %s632 = sand.u32 %s208, 1
        %s633 = scalar_lea.sflag [#allocation4], %s632
        %s634 = sand.u32 %s208, 1
        %s635 = smul.addr %s634, 4
        %s636 = scalar_lea.vmem [#allocation10], %s635
        %s637 = sand.u32 %s32, 1
        %s638 = scalar_lea.sflag [#allocation12], %s637
        %s639 = sand.u32 %s236, 1
        %s640 = smul.addr %s639, 4
        %s641 = scalar_lea.vmem [#allocation11], %s640
        %s642 = sand.u32 %s32, 1
        %s643 = scalar_lea.sflag [#allocation12], %s642
        %s644 = sand.u32 %s264, 1
        %s645 = smul.addr %s644, 4
        %s646 = scalar_lea.vmem [#allocation13], %s645
        // Predicated region
        $region65: #{tpu_custom_call.1} parent=47 // pred_check
          %p647 = pneg %p218
        $region66: #{tpu_custom_call.1} parent=47 // pred_check_branch
          %649 = sbr.rel (%p647) target = $region68
        $region67: #{tpu_custom_call.1} parent=47 // pred_region
          %s651 = ssub.s32 64, 64
          %652 = vsyncadd %s633, %s651
          %s653 = sadd.s32 %s37, %s36
          %s654 = smul.addr %s653, 64
          %s655 = scalar_lea.hbm %s7, %s654
          %s657 = sshll.u32 %s636, 4
          %s658 = int_to_ptr.vmem [resolvable:$true] %s657
          %660 = dma.vmem_to_hbm [thread:$0]  %s658, 64, %s655, %s633
        $region68: #{tpu_custom_call.1} parent=47 // pred_fallthru
          _
        // Predicated region
        $region69: #{tpu_custom_call.1} parent=47 // pred_check
          %p661 = pneg %p246
        $region70: #{tpu_custom_call.1} parent=47 // pred_check_branch
          %663 = sbr.rel (%p661) target = $region72
        $region71: #{tpu_custom_call.1} parent=47 // pred_region
          %s665 = ssub.s32 64, 64
          %666 = vsyncadd %s638, %s665
          %s667 = sadd.s32 %s37, %s36
          %s668 = smul.addr %s667, 64
          %s669 = scalar_lea.hbm %s8, %s668
          %s671 = sshll.u32 %s641, 4
          %s672 = int_to_ptr.vmem [resolvable:$true] %s671
          %674 = dma.vmem_to_hbm [thread:$0]  %s672, 64, %s669, %s638
        $region72: #{tpu_custom_call.1} parent=47 // pred_fallthru
          _
        // Predicated region
        $region73: #{tpu_custom_call.1} parent=47 // pred_check
          %p675 = pneg %p274
        $region74: #{tpu_custom_call.1} parent=47 // pred_check_branch
          %677 = sbr.rel (%p675) target = $region76
        $region75: #{tpu_custom_call.1} parent=47 // pred_region
          %s679 = ssub.s32 64, 64
          %680 = vsyncadd %s643, %s679
          %s681 = sadd.s32 %s37, %s36
          %s682 = smul.addr %s681, 64
          %s683 = scalar_lea.hbm %s9, %s682
          %s685 = sshll.u32 %s646, 4
          %s686 = int_to_ptr.vmem [resolvable:$true] %s685
          %688 = dma.vmem_to_hbm [thread:$0]  %s686, 64, %s683, %s643
        $region76: #{tpu_custom_call.1} parent=47 // pred_fallthru
          _
      $region48: #{tpu_custom_call.1} parent=5 // pred_fallthru
        _
      %p689 = scmp.le.s32.totalorder 2, %s27
      // Predicated region
      $region77: #{tpu_custom_call.1} parent=5 // pred_check
        %p690 = pneg %p689
      $region78: #{tpu_custom_call.1} parent=5 // pred_check_branch
        %692 = sbr.rel (%p690) target = $region80
      $region79: #{tpu_custom_call.1} parent=5 // pred_region
        %s693 = ssub.s32 %s27, 2
        // Predicated region
        $region81: #{tpu_custom_call.1} parent=79 // pred_check
          %p694 = pneg %p224
        $region82: #{tpu_custom_call.1} parent=79 // pred_check_branch
          %696 = sbr.rel (%p694) target = $region84
        $region83: #{tpu_custom_call.1} parent=79 // pred_region
          %s697 = sand.u32 %s209, 1
          %s698 = scalar_lea.sflag [#allocation4], %s697
          %s699 = sand.u32 %s209, 1
          %s700 = smul.addr %s699, 4
          %s701 = scalar_lea.vmem [#allocation10], %s700
          %702 = dma.done %s698, 64
        $region84: #{tpu_custom_call.1} parent=79 // pred_fallthru
          _
        // Predicated region
        $region85: #{tpu_custom_call.1} parent=79 // pred_check
          %p703 = pneg %p252
        $region86: #{tpu_custom_call.1} parent=79 // pred_check_branch
          %705 = sbr.rel (%p703) target = $region88
        $region87: #{tpu_custom_call.1} parent=79 // pred_region
          %s706 = sand.u32 %s33, 1
          %s707 = scalar_lea.sflag [#allocation12], %s706
          %s708 = sand.u32 %s237, 1
          %s709 = smul.addr %s708, 4
          %s710 = scalar_lea.vmem [#allocation11], %s709
          %711 = dma.done %s707, 64
        $region88: #{tpu_custom_call.1} parent=79 // pred_fallthru
          _
        // Predicated region
        $region89: #{tpu_custom_call.1} parent=79 // pred_check
          %p712 = pneg %p280
        $region90: #{tpu_custom_call.1} parent=79 // pred_check_branch
          %714 = sbr.rel (%p712) target = $region92
        $region91: #{tpu_custom_call.1} parent=79 // pred_region
          %s715 = sand.u32 %s33, 1
          %s716 = scalar_lea.sflag [#allocation12], %s715
          %s717 = sand.u32 %s265, 1
          %s718 = smul.addr %s717, 4
          %s719 = scalar_lea.vmem [#allocation13], %s718
          %720 = dma.done %s716, 64
        $region92: #{tpu_custom_call.1} parent=79 // pred_fallthru
          _
      $region80: #{tpu_custom_call.1} parent=5 // pred_fallthru
        _
    $region6: #{tpu_custom_call.1} parent=1 // loop_footer
      %s31 = sadd.s32 1, %s27
    $region7: #{tpu_custom_call.1} parent=1 // loop_footer_branch
      %26 = sbr.rel target = $region3
    $region8: #{tpu_custom_call.1} parent=1 // loop_exit
      _
    %721 = vsyncpa [#allocation3], 1
    %s722 = scalar_lea.sflag [#allocation3], 1
    %723 = vsyncpa %s722, 1
    %724 = vsyncpa [#allocation6], 1
    %725 = vsyncpa [#allocation9], 1
    %726 = vsyncpa [#allocation4], 1
    %s727 = scalar_lea.sflag [#allocation4], 1
    %728 = vsyncpa %s727, 1
    %729 = vsyncpa [#allocation12], 1
    %s730 = scalar_lea.sflag [#allocation12], 1
    %731 = vsyncpa %s730, 1

</llo_original>
